<compile_context>
chip_gen: v6e
topology: v6e:2x2x1
jax: 0.10.0
libtpu: 0.0.40
codegen_flags: <defaults>
</compile_context>

<pallas_src>
import functools
import math

import jax
import jax.numpy as jnp
from jax import lax
from jax.experimental import pallas as pl
from jax.experimental.pallas import tpu as pltpu


def encoder_kernel(nhead,
                   emb_ref, mask_ref,
                   wqkv_ref, bqkv_ref, woT_ref, ln_ref,
                   w1_ref, b1_ref, w2_ref, wfc_ref, bfc_ref,
                   out_ref):
    Bblk, S, D = emb_ref.shape
    H = nhead
    hd = D // H
    scale = 1.0 / math.sqrt(hd)

    x = emb_ref[...].reshape(Bblk * S, D)                 # (Bblk*S, D) f32
    ln = ln_ref[...]                                      # (8, D) f32
    g1, be1 = ln[0:1, :], ln[1:2, :]
    g2, be2 = ln[2:3, :], ln[3:4, :]
    gf, bef = ln[4:5, :], ln[5:6, :]
    bo, b2 = ln[6:7, :], ln[7:8, :]

    # ---- fused QKV projection: one bf16 MXU matmul, f32 accumulation ----
    qkv = jnp.dot(x.astype(jnp.bfloat16), wqkv_ref[...],
                  preferred_element_type=jnp.float32) + bqkv_ref[...]   # (Bblk*S, 3D)

    # ---- per-sequence multi-head attention (tiny S; score math stays f32) ----
    o_rows = []
    for b in range(Bblk):
        qkv_b = qkv[b * S:(b + 1) * S, :]                                # (S, 3D)
        maskv = mask_ref[b]                                              # (1, S) 1=keep 0=pad
        key_bias = jnp.where(maskv == 0.0, -1e30, 0.0).astype(jnp.float32)
        heads = []
        for h in range(H):
            q_h = qkv_b[:, h * hd:(h + 1) * hd]                          # (S, hd)
            k_h = qkv_b[:, D + h * hd:D + (h + 1) * hd]
            v_h = qkv_b[:, 2 * D + h * hd:2 * D + (h + 1) * hd]
            s = lax.dot_general(q_h, k_h, (((1,), (1,)), ((), ())),
                                preferred_element_type=jnp.float32) * scale  # (S, S)
            s = s + key_bias
            s = s - jnp.max(s, axis=-1, keepdims=True)
            p = jnp.exp(s)
            p = p * pl.reciprocal(jnp.sum(p, axis=-1, keepdims=True), approx=True)
            heads.append(jnp.dot(p, v_h, preferred_element_type=jnp.float32))  # (S, hd)
        o_rows.append(jnp.concatenate(heads, axis=-1))                   # (S, D)
    o_cat = o_rows[0] if Bblk == 1 else jnp.concatenate(o_rows, axis=0)  # (Bblk*S, D)

    # ---- fused output projection: one bf16 matmul ----
    attn_out = jnp.dot(o_cat.astype(jnp.bfloat16), woT_ref[...],
                       preferred_element_type=jnp.float32) + bo          # (Bblk*S, D)

    def layernorm(y, g, b):
        mu = jnp.mean(y, axis=-1, keepdims=True)
        var = jnp.mean((y - mu) ** 2, axis=-1, keepdims=True)
        return (y - mu) * lax.rsqrt(var + 1e-5) * g + b

    # residual + norm1
    x1 = layernorm(x + attn_out, g1, be1)

    # feed-forward (dff padded to a full lane tile; zero pads are exact no-ops)
    ff = jnp.dot(x1.astype(jnp.bfloat16), w1_ref[...],
                 preferred_element_type=jnp.float32) + b1_ref[...]
    ff = jnp.maximum(ff, 0.0)
    ff = jnp.dot(ff.astype(jnp.bfloat16), w2_ref[...],
                 preferred_element_type=jnp.float32) + b2

    # residual + norm2
    x2 = layernorm(x1 + ff, g2, be2)

    # classifier only needs the last token of each sequence; apply the final
    # encoder LayerNorm just to those rows (identical result for the output).
    last_rows = [x2[b * S + (S - 1):b * S + S, :] for b in range(Bblk)]
    last = last_rows[0] if Bblk == 1 else jnp.concatenate(last_rows, axis=0)  # (Bblk, D)
    last = layernorm(last, gf, bef)

    # classifier + softmax over a lane-dense padded class dim (pads biased to -1e30)
    logit = jnp.dot(last.astype(jnp.bfloat16), wfc_ref[...],
                    preferred_element_type=jnp.float32) + bfc_ref[...]   # (Bblk, Cpad)
    logit = logit - jnp.max(logit, axis=-1, keepdims=True)
    e = jnp.exp(logit)
    probs = e * pl.reciprocal(jnp.sum(e, axis=-1, keepdims=True), approx=True)
    out_ref[...] = probs.reshape(Bblk, 1, -1)


def transformer_classifier(x_ids, mask, params, block_b=None):
    # glue: embedding gather in plain JAX
    emb = params["embedding"][x_ids].astype(jnp.float32)          # (B, S, D)
    B, S, D = emb.shape
    H = params["nhead"]
    n_class = params["n_class"]
    Cpad = params["wfc"].shape[1]

    if block_b is None:
        # fold batch rows into each grid step, but keep >=2 grid steps when possible
        # (v7x has 2 TensorCores; the parallel batch axis is what splits work across them)
        block_b = 1
        for cand in range(min(max(B // 2, 1), 16), 0, -1):
            if B % cand == 0:
                block_b = cand
                break
    assert B % block_b == 0
    grid_b = B // block_b

    mask3 = mask.astype(jnp.float32).reshape(B, 1, S)

    wnames = ["wqkv", "bqkv", "woT", "lnpk", "w1", "b1", "w2", "wfc", "bfc"]
    weights = [params[n] for n in wnames]

    def full_spec(arr):
        nd = arr.ndim
        return pl.BlockSpec(arr.shape, lambda b, _nd=nd: (0,) * _nd)

    in_specs = ([pl.BlockSpec((block_b, S, D), lambda b: (b, 0, 0)),
                 pl.BlockSpec((block_b, 1, S), lambda b: (b, 0, 0))]
                + [full_spec(w) for w in weights])

    out = pl.pallas_call(
        functools.partial(encoder_kernel, H),
        grid=(grid_b,),
        in_specs=in_specs,
        out_specs=pl.BlockSpec((block_b, 1, Cpad), lambda b: (b, 0, 0)),
        out_shape=jax.ShapeDtypeStruct((B, 1, Cpad), jnp.float32),
        compiler_params=pltpu.CompilerParams(dimension_semantics=("parallel",)),
    )(emb, mask3, *weights)
    return out.reshape(B, Cpad)[:, :n_class]


def init_params(key, vocab, d_model, nhead, dff, n_class):
    ks = jax.random.split(key, 12)

    def rnd(k, shape, scale=0.1):
        return jax.random.normal(k, shape, jnp.float32) * scale

    embedding = rnd(ks[0], (vocab, d_model), 1.0)

    # MultiheadAttention in_proj (3D, D) / in_proj_bias (3D,), fused as x @ Wqkv (D, 3D)
    in_w = rnd(ks[1], (3 * d_model, d_model))
    in_b = rnd(ks[2], (3 * d_model,))
    wqkv = in_w.T                                   # (D, 3D): heads contiguous in lane chunks
    bqkv = in_b.reshape(1, 3 * d_model)

    wo = rnd(ks[3], (d_model, d_model))             # out_proj weight (D, D)
    bo = rnd(ks[4], (d_model,))
    woT = wo.T

    # FFN, padded to a full 128-lane tile on the dff axis (zero pads are exact no-ops)
    dffp = max(128, ((dff + 127) // 128) * 128)
    w1 = rnd(ks[5], (dff, d_model))
    b1 = rnd(ks[6], (dff,))
    w2 = rnd(ks[7], (d_model, dff))
    b2 = rnd(ks[8], (d_model,))
    w1p = jnp.zeros((d_model, dffp), jnp.float32).at[:, :dff].set(w1.T)
    b1p = jnp.zeros((1, dffp), jnp.float32).at[:, :dff].set(b1)
    w2p = jnp.zeros((dffp, d_model), jnp.float32).at[:dff, :].set(w2.T)

    # classifier, padded to 128 output lanes; padded logits biased to -1e30 so softmax ignores them
    cpad = max(128, ((n_class + 127) // 128) * 128)
    wfc = rnd(ks[9], (n_class, d_model))
    bfc = rnd(ks[10], (n_class,))
    wfcp = jnp.zeros((d_model, cpad), jnp.float32).at[:, :n_class].set(wfc.T)
    bfcp = jnp.full((1, cpad), -1e30, jnp.float32).at[:, :n_class].set(bfc)

    ones_d = jnp.ones((d_model,), jnp.float32)
    zeros_d = jnp.zeros((d_model,), jnp.float32)
    # packed small params: [g1, be1, g2, be2, gf, bef, attn_out_bias, ffn_out_bias]
    lnpk = jnp.stack([ones_d, zeros_d, ones_d, zeros_d, ones_d, zeros_d, bo, b2], axis=0)

    bf16 = jnp.bfloat16
    return dict(
        embedding=embedding,
        wqkv=wqkv.astype(bf16), bqkv=bqkv,
        woT=woT.astype(bf16),
        lnpk=lnpk,
        w1=w1p.astype(bf16), b1=b1p, w2=w2p.astype(bf16),
        wfc=wfcp.astype(bf16), bfc=bfcp,
        nhead=nhead, n_class=n_class,
    )


if __name__ == "__main__":
    B, S, V = 2, 8, 32
    D, H, DFF, C = 32, 8, 64, 4          # d_model=32, nhead=8, dim_feedforward=64, n_class=4

    key = jax.random.PRNGKey(0)
    kp, kx = jax.random.split(key)
    params = init_params(kp, V, D, H, DFF, C)

    x_ids = jax.random.randint(kx, (B, S), 0, V)
    mask = jnp.array([[1, 1, 1, 1, 1, 1, 1, 1],
                      [1, 1, 1, 1, 1, 0, 0, 0]], jnp.int32)

    probs = transformer_classifier(x_ids, mask, params)
    jax.block_until_ready(probs)
    print("KERNEL_OK")
</pallas_src>

<mosaic_0001>
module attributes {stable_mosaic.version = 11 : i64} {
  func.func @encoder_kernel(%arg0: i32, %arg1: memref<1x8x32xf32, #tpu.memory_space<vmem>>, %arg2: memref<1x1x8xf32, #tpu.memory_space<vmem>>, %arg3: memref<32x96xbf16, #tpu.memory_space<vmem>>, %arg4: memref<1x96xf32, #tpu.memory_space<vmem>>, %arg5: memref<32x32xbf16, #tpu.memory_space<vmem>>, %arg6: memref<8x32xf32, #tpu.memory_space<vmem>>, %arg7: memref<32x128xbf16, #tpu.memory_space<vmem>>, %arg8: memref<1x128xf32, #tpu.memory_space<vmem>>, %arg9: memref<128x32xbf16, #tpu.memory_space<vmem>>, %arg10: memref<32x128xbf16, #tpu.memory_space<vmem>>, %arg11: memref<1x128xf32, #tpu.memory_space<vmem>>, %arg12: memref<1x1x128xf32, #tpu.memory_space<vmem>>) attributes {dimension_semantics = [#tpu.dimension_semantics<parallel>], iteration_bounds = array<i64: 2>, scalar_prefetch = 0 : i64, scratch_operands = 0 : i64, tpu.core_type = #tpu.core_type<tc>, window_params = [{transform_indices = @transform_0, window_bounds = array<i64: 1, 8, 32>}, {transform_indices = @transform_1, window_bounds = array<i64: 1, 1, 8>}, {pipeline_mode = #tpu.pipeline_mode<synchronous>, transform_indices = @transform_2, window_bounds = array<i64: 32, 96>}, {pipeline_mode = #tpu.pipeline_mode<synchronous>, transform_indices = @transform_3, window_bounds = array<i64: 1, 96>}, {pipeline_mode = #tpu.pipeline_mode<synchronous>, transform_indices = @transform_4, window_bounds = array<i64: 32, 32>}, {pipeline_mode = #tpu.pipeline_mode<synchronous>, transform_indices = @transform_5, window_bounds = array<i64: 8, 32>}, {pipeline_mode = #tpu.pipeline_mode<synchronous>, transform_indices = @transform_6, window_bounds = array<i64: 32, 128>}, {pipeline_mode = #tpu.pipeline_mode<synchronous>, transform_indices = @transform_7, window_bounds = array<i64: 1, 128>}, {pipeline_mode = #tpu.pipeline_mode<synchronous>, transform_indices = @transform_8, window_bounds = array<i64: 128, 32>}, {pipeline_mode = #tpu.pipeline_mode<synchronous>, transform_indices = @transform_9, window_bounds = array<i64: 32, 128>}, {pipeline_mode = #tpu.pipeline_mode<synchronous>, transform_indices = @transform_10, window_bounds = array<i64: 1, 128>}, {transform_indices = @transform_11, window_bounds = array<i64: 1, 1, 128>}]} {
    %c0 = arith.constant 0 : index
    %c0_0 = arith.constant 0 : index
    %c0_1 = arith.constant 0 : index
    %0 = vector.load %arg1[%c0, %c0_0, %c0_1] : memref<1x8x32xf32, #tpu.memory_space<vmem>>, vector<1x8x32xf32>
    %1 = vector.shape_cast %0 : vector<1x8x32xf32> to vector<8x32xf32>
    %c0_2 = arith.constant 0 : index
    %c0_3 = arith.constant 0 : index
    %2 = vector.load %arg6[%c0_2, %c0_3] : memref<8x32xf32, #tpu.memory_space<vmem>>, vector<8x32xf32>
    %3 = vector.extract_strided_slice %2 {offsets = [0, 0], sizes = [1, 32], strides = [1, 1]} : vector<8x32xf32> to vector<1x32xf32>
    %4 = vector.extract_strided_slice %2 {offsets = [1, 0], sizes = [1, 32], strides = [1, 1]} : vector<8x32xf32> to vector<1x32xf32>
    %5 = vector.extract_strided_slice %2 {offsets = [2, 0], sizes = [1, 32], strides = [1, 1]} : vector<8x32xf32> to vector<1x32xf32>
    %6 = vector.extract_strided_slice %2 {offsets = [3, 0], sizes = [1, 32], strides = [1, 1]} : vector<8x32xf32> to vector<1x32xf32>
    %7 = vector.extract_strided_slice %2 {offsets = [4, 0], sizes = [1, 32], strides = [1, 1]} : vector<8x32xf32> to vector<1x32xf32>
    %8 = vector.extract_strided_slice %2 {offsets = [5, 0], sizes = [1, 32], strides = [1, 1]} : vector<8x32xf32> to vector<1x32xf32>
    %9 = vector.extract_strided_slice %2 {offsets = [6, 0], sizes = [1, 32], strides = [1, 1]} : vector<8x32xf32> to vector<1x32xf32>
    %10 = vector.extract_strided_slice %2 {offsets = [7, 0], sizes = [1, 32], strides = [1, 1]} : vector<8x32xf32> to vector<1x32xf32>
    %11 = arith.truncf %1 : vector<8x32xf32> to vector<8x32xbf16>
    %c0_4 = arith.constant 0 : index
    %c0_5 = arith.constant 0 : index
    %12 = vector.load %arg3[%c0_4, %c0_5] : memref<32x96xbf16, #tpu.memory_space<vmem>>, vector<32x96xbf16>
    %cst = arith.constant dense<0.000000e+00> : vector<8x96xf32>
    %13 = tpu.matmul %11, %12, %cst {dimension_numbers = #tpu.dot_dimension_numbers<[1], [0], [0], [1], [0, 0, 1, 1], [], []>} : vector<8x32xbf16>, vector<32x96xbf16>, vector<8x96xf32> -> vector<8x96xf32>
    %c0_6 = arith.constant 0 : index
    %c0_7 = arith.constant 0 : index
    %14 = vector.load %arg4[%c0_6, %c0_7] : memref<1x96xf32, #tpu.memory_space<vmem>>, vector<1x96xf32>
    %15 = vector.broadcast %14 : vector<1x96xf32> to vector<8x96xf32>
    %16 = arith.addf %13, %15 : vector<8x96xf32>
    %c0_8 = arith.constant 0 : index
    %c0_9 = arith.constant 0 : index
    %c0_10 = arith.constant 0 : index
    %17 = vector.load %arg2[%c0_8, %c0_9, %c0_10] : memref<1x1x8xf32, #tpu.memory_space<vmem>>, vector<1x1x8xf32>
    %18 = vector.shape_cast %17 : vector<1x1x8xf32> to vector<1x8xf32>
    %cst_11 = arith.constant 0.000000e+00 : f32
    %19 = vector.broadcast %cst_11 : f32 to vector<1x8xf32>
    %20 = arith.cmpf oeq, %18, %19 : vector<1x8xf32>
    %cst_12 = arith.constant -1.000000e+30 : f32
    %cst_13 = arith.constant 0.000000e+00 : f32
    %21 = vector.broadcast %cst_12 : f32 to vector<1x8xf32>
    %22 = vector.broadcast %cst_13 : f32 to vector<1x8xf32>
    %23 = arith.select %20, %21, %22 : vector<1x8xi1>, vector<1x8xf32>
    %24 = vector.extract_strided_slice %16 {offsets = [0, 0], sizes = [8, 4], strides = [1, 1]} : vector<8x96xf32> to vector<8x4xf32>
    %25 = vector.extract_strided_slice %16 {offsets = [0, 32], sizes = [8, 4], strides = [1, 1]} : vector<8x96xf32> to vector<8x4xf32>
    %26 = vector.extract_strided_slice %16 {offsets = [0, 64], sizes = [8, 4], strides = [1, 1]} : vector<8x96xf32> to vector<8x4xf32>
    %cst_14 = arith.constant dense<0.000000e+00> : vector<8x8xf32>
    %27 = tpu.matmul %24, %25, %cst_14 {dimension_numbers = #tpu.dot_dimension_numbers<[1], [1], [0], [0], [0, 0, 1, 0], [], []>} : vector<8x4xf32>, vector<8x4xf32>, vector<8x8xf32> -> vector<8x8xf32>
    %cst_15 = arith.constant 5.000000e-01 : f32
    %28 = vector.broadcast %cst_15 : f32 to vector<8x8xf32>
    %29 = arith.mulf %27, %28 : vector<8x8xf32>
    %30 = vector.broadcast %23 : vector<1x8xf32> to vector<8x8xf32>
    %31 = arith.addf %29, %30 : vector<8x8xf32>
    %cst_16 = arith.constant dense<0xFF800000> : vector<8xf32>
    %32 = vector.multi_reduction <maximumf>, %31, %cst_16 [1] : vector<8x8xf32> to vector<8xf32>
    %33 = vector.shape_cast %32 : vector<8xf32> to vector<8x1xf32>
    %34 = vector.broadcast %33 : vector<8x1xf32> to vector<8x8xf32>
    %35 = arith.subf %31, %34 : vector<8x8xf32>
    %36 = math.exp %35 : vector<8x8xf32>
    %cst_17 = arith.constant dense<0.000000e+00> : vector<8xf32>
    %37 = vector.multi_reduction <add>, %36, %cst_17 [1] : vector<8x8xf32> to vector<8xf32>
    %38 = vector.shape_cast %37 : vector<8xf32> to vector<8x1xf32>
    %39 = tpu.reciprocal %38 {approx = true} : vector<8x1xf32> -> vector<8x1xf32>
    %40 = vector.broadcast %39 : vector<8x1xf32> to vector<8x8xf32>
    %41 = arith.mulf %36, %40 : vector<8x8xf32>
    %cst_18 = arith.constant dense<0.000000e+00> : vector<8x4xf32>
    %42 = tpu.matmul %41, %26, %cst_18 {dimension_numbers = #tpu.dot_dimension_numbers<[1], [0], [0], [1], [0, 0, 1, 1], [], []>} : vector<8x8xf32>, vector<8x4xf32>, vector<8x4xf32> -> vector<8x4xf32>
    %43 = vector.extract_strided_slice %16 {offsets = [0, 4], sizes = [8, 4], strides = [1, 1]} : vector<8x96xf32> to vector<8x4xf32>
    %44 = vector.extract_strided_slice %16 {offsets = [0, 36], sizes = [8, 4], strides = [1, 1]} : vector<8x96xf32> to vector<8x4xf32>
    %45 = vector.extract_strided_slice %16 {offsets = [0, 68], sizes = [8, 4], strides = [1, 1]} : vector<8x96xf32> to vector<8x4xf32>
    %cst_19 = arith.constant dense<0.000000e+00> : vector<8x8xf32>
    %46 = tpu.matmul %43, %44, %cst_19 {dimension_numbers = #tpu.dot_dimension_numbers<[1], [1], [0], [0], [0, 0, 1, 0], [], []>} : vector<8x4xf32>, vector<8x4xf32>, vector<8x8xf32> -> vector<8x8xf32>
    %cst_20 = arith.constant 5.000000e-01 : f32
    %47 = vector.broadcast %cst_20 : f32 to vector<8x8xf32>
    %48 = arith.mulf %46, %47 : vector<8x8xf32>
    %49 = vector.broadcast %23 : vector<1x8xf32> to vector<8x8xf32>
    %50 = arith.addf %48, %49 : vector<8x8xf32>
    %cst_21 = arith.constant dense<0xFF800000> : vector<8xf32>
    %51 = vector.multi_reduction <maximumf>, %50, %cst_21 [1] : vector<8x8xf32> to vector<8xf32>
    %52 = vector.shape_cast %51 : vector<8xf32> to vector<8x1xf32>
    %53 = vector.broadcast %52 : vector<8x1xf32> to vector<8x8xf32>
    %54 = arith.subf %50, %53 : vector<8x8xf32>
    %55 = math.exp %54 : vector<8x8xf32>
    %cst_22 = arith.constant dense<0.000000e+00> : vector<8xf32>
    %56 = vector.multi_reduction <add>, %55, %cst_22 [1] : vector<8x8xf32> to vector<8xf32>
    %57 = vector.shape_cast %56 : vector<8xf32> to vector<8x1xf32>
    %58 = tpu.reciprocal %57 {approx = true} : vector<8x1xf32> -> vector<8x1xf32>
    %59 = vector.broadcast %58 : vector<8x1xf32> to vector<8x8xf32>
    %60 = arith.mulf %55, %59 : vector<8x8xf32>
    %cst_23 = arith.constant dense<0.000000e+00> : vector<8x4xf32>
    %61 = tpu.matmul %60, %45, %cst_23 {dimension_numbers = #tpu.dot_dimension_numbers<[1], [0], [0], [1], [0, 0, 1, 1], [], []>} : vector<8x8xf32>, vector<8x4xf32>, vector<8x4xf32> -> vector<8x4xf32>
    %62 = vector.extract_strided_slice %16 {offsets = [0, 8], sizes = [8, 4], strides = [1, 1]} : vector<8x96xf32> to vector<8x4xf32>
    %63 = vector.extract_strided_slice %16 {offsets = [0, 40], sizes = [8, 4], strides = [1, 1]} : vector<8x96xf32> to vector<8x4xf32>
    %64 = vector.extract_strided_slice %16 {offsets = [0, 72], sizes = [8, 4], strides = [1, 1]} : vector<8x96xf32> to vector<8x4xf32>
    %cst_24 = arith.constant dense<0.000000e+00> : vector<8x8xf32>
    %65 = tpu.matmul %62, %63, %cst_24 {dimension_numbers = #tpu.dot_dimension_numbers<[1], [1], [0], [0], [0, 0, 1, 0], [], []>} : vector<8x4xf32>, vector<8x4xf32>, vector<8x8xf32> -> vector<8x8xf32>
    %cst_25 = arith.constant 5.000000e-01 : f32
    %66 = vector.broadcast %cst_25 : f32 to vector<8x8xf32>
    %67 = arith.mulf %65, %66 : vector<8x8xf32>
    %68 = vector.broadcast %23 : vector<1x8xf32> to vector<8x8xf32>
    %69 = arith.addf %67, %68 : vector<8x8xf32>
    %cst_26 = arith.constant dense<0xFF800000> : vector<8xf32>
    %70 = vector.multi_reduction <maximumf>, %69, %cst_26 [1] : vector<8x8xf32> to vector<8xf32>
    %71 = vector.shape_cast %70 : vector<8xf32> to vector<8x1xf32>
    %72 = vector.broadcast %71 : vector<8x1xf32> to vector<8x8xf32>
    %73 = arith.subf %69, %72 : vector<8x8xf32>
    %74 = math.exp %73 : vector<8x8xf32>
    %cst_27 = arith.constant dense<0.000000e+00> : vector<8xf32>
    %75 = vector.multi_reduction <add>, %74, %cst_27 [1] : vector<8x8xf32> to vector<8xf32>
    %76 = vector.shape_cast %75 : vector<8xf32> to vector<8x1xf32>
    %77 = tpu.reciprocal %76 {approx = true} : vector<8x1xf32> -> vector<8x1xf32>
    %78 = vector.broadcast %77 : vector<8x1xf32> to vector<8x8xf32>
    %79 = arith.mulf %74, %78 : vector<8x8xf32>
    %cst_28 = arith.constant dense<0.000000e+00> : vector<8x4xf32>
    %80 = tpu.matmul %79, %64, %cst_28 {dimension_numbers = #tpu.dot_dimension_numbers<[1], [0], [0], [1], [0, 0, 1, 1], [], []>} : vector<8x8xf32>, vector<8x4xf32>, vector<8x4xf32> -> vector<8x4xf32>
    %81 = vector.extract_strided_slice %16 {offsets = [0, 12], sizes = [8, 4], strides = [1, 1]} : vector<8x96xf32> to vector<8x4xf32>
    %82 = vector.extract_strided_slice %16 {offsets = [0, 44], sizes = [8, 4], strides = [1, 1]} : vector<8x96xf32> to vector<8x4xf32>
    %83 = vector.extract_strided_slice %16 {offsets = [0, 76], sizes = [8, 4], strides = [1, 1]} : vector<8x96xf32> to vector<8x4xf32>
    %cst_29 = arith.constant dense<0.000000e+00> : vector<8x8xf32>
    %84 = tpu.matmul %81, %82, %cst_29 {dimension_numbers = #tpu.dot_dimension_numbers<[1], [1], [0], [0], [0, 0, 1, 0], [], []>} : vector<8x4xf32>, vector<8x4xf32>, vector<8x8xf32> -> vector<8x8xf32>
    %cst_30 = arith.constant 5.000000e-01 : f32
    %85 = vector.broadcast %cst_30 : f32 to vector<8x8xf32>
    %86 = arith.mulf %84, %85 : vector<8x8xf32>
    %87 = vector.broadcast %23 : vector<1x8xf32> to vector<8x8xf32>
    %88 = arith.addf %86, %87 : vector<8x8xf32>
    %cst_31 = arith.constant dense<0xFF800000> : vector<8xf32>
    %89 = vector.multi_reduction <maximumf>, %88, %cst_31 [1] : vector<8x8xf32> to vector<8xf32>
    %90 = vector.shape_cast %89 : vector<8xf32> to vector<8x1xf32>
    %91 = vector.broadcast %90 : vector<8x1xf32> to vector<8x8xf32>
    %92 = arith.subf %88, %91 : vector<8x8xf32>
    %93 = math.exp %92 : vector<8x8xf32>
    %cst_32 = arith.constant dense<0.000000e+00> : vector<8xf32>
    %94 = vector.multi_reduction <add>, %93, %cst_32 [1] : vector<8x8xf32> to vector<8xf32>
    %95 = vector.shape_cast %94 : vector<8xf32> to vector<8x1xf32>
    %96 = tpu.reciprocal %95 {approx = true} : vector<8x1xf32> -> vector<8x1xf32>
    %97 = vector.broadcast %96 : vector<8x1xf32> to vector<8x8xf32>
    %98 = arith.mulf %93, %97 : vector<8x8xf32>
    %cst_33 = arith.constant dense<0.000000e+00> : vector<8x4xf32>
    %99 = tpu.matmul %98, %83, %cst_33 {dimension_numbers = #tpu.dot_dimension_numbers<[1], [0], [0], [1], [0, 0, 1, 1], [], []>} : vector<8x8xf32>, vector<8x4xf32>, vector<8x4xf32> -> vector<8x4xf32>
    %100 = vector.extract_strided_slice %16 {offsets = [0, 16], sizes = [8, 4], strides = [1, 1]} : vector<8x96xf32> to vector<8x4xf32>
    %101 = vector.extract_strided_slice %16 {offsets = [0, 48], sizes = [8, 4], strides = [1, 1]} : vector<8x96xf32> to vector<8x4xf32>
    %102 = vector.extract_strided_slice %16 {offsets = [0, 80], sizes = [8, 4], strides = [1, 1]} : vector<8x96xf32> to vector<8x4xf32>
    %cst_34 = arith.constant dense<0.000000e+00> : vector<8x8xf32>
    %103 = tpu.matmul %100, %101, %cst_34 {dimension_numbers = #tpu.dot_dimension_numbers<[1], [1], [0], [0], [0, 0, 1, 0], [], []>} : vector<8x4xf32>, vector<8x4xf32>, vector<8x8xf32> -> vector<8x8xf32>
    %cst_35 = arith.constant 5.000000e-01 : f32
    %104 = vector.broadcast %cst_35 : f32 to vector<8x8xf32>
    %105 = arith.mulf %103, %104 : vector<8x8xf32>
    %106 = vector.broadcast %23 : vector<1x8xf32> to vector<8x8xf32>
    %107 = arith.addf %105, %106 : vector<8x8xf32>
    %cst_36 = arith.constant dense<0xFF800000> : vector<8xf32>
    %108 = vector.multi_reduction <maximumf>, %107, %cst_36 [1] : vector<8x8xf32> to vector<8xf32>
    %109 = vector.shape_cast %108 : vector<8xf32> to vector<8x1xf32>
    %110 = vector.broadcast %109 : vector<8x1xf32> to vector<8x8xf32>
    %111 = arith.subf %107, %110 : vector<8x8xf32>
    %112 = math.exp %111 : vector<8x8xf32>
    %cst_37 = arith.constant dense<0.000000e+00> : vector<8xf32>
    %113 = vector.multi_reduction <add>, %112, %cst_37 [1] : vector<8x8xf32> to vector<8xf32>
    %114 = vector.shape_cast %113 : vector<8xf32> to vector<8x1xf32>
    %115 = tpu.reciprocal %114 {approx = true} : vector<8x1xf32> -> vector<8x1xf32>
    %116 = vector.broadcast %115 : vector<8x1xf32> to vector<8x8xf32>
    %117 = arith.mulf %112, %116 : vector<8x8xf32>
    %cst_38 = arith.constant dense<0.000000e+00> : vector<8x4xf32>
    %118 = tpu.matmul %117, %102, %cst_38 {dimension_numbers = #tpu.dot_dimension_numbers<[1], [0], [0], [1], [0, 0, 1, 1], [], []>} : vector<8x8xf32>, vector<8x4xf32>, vector<8x4xf32> -> vector<8x4xf32>
    %119 = vector.extract_strided_slice %16 {offsets = [0, 20], sizes = [8, 4], strides = [1, 1]} : vector<8x96xf32> to vector<8x4xf32>
    %120 = vector.extract_strided_slice %16 {offsets = [0, 52], sizes = [8, 4], strides = [1, 1]} : vector<8x96xf32> to vector<8x4xf32>
    %121 = vector.extract_strided_slice %16 {offsets = [0, 84], sizes = [8, 4], strides = [1, 1]} : vector<8x96xf32> to vector<8x4xf32>
    %cst_39 = arith.constant dense<0.000000e+00> : vector<8x8xf32>
    %122 = tpu.matmul %119, %120, %cst_39 {dimension_numbers = #tpu.dot_dimension_numbers<[1], [1], [0], [0], [0, 0, 1, 0], [], []>} : vector<8x4xf32>, vector<8x4xf32>, vector<8x8xf32> -> vector<8x8xf32>
    %cst_40 = arith.constant 5.000000e-01 : f32
    %123 = vector.broadcast %cst_40 : f32 to vector<8x8xf32>
    %124 = arith.mulf %122, %123 : vector<8x8xf32>
    %125 = vector.broadcast %23 : vector<1x8xf32> to vector<8x8xf32>
    %126 = arith.addf %124, %125 : vector<8x8xf32>
    %cst_41 = arith.constant dense<0xFF800000> : vector<8xf32>
    %127 = vector.multi_reduction <maximumf>, %126, %cst_41 [1] : vector<8x8xf32> to vector<8xf32>
    %128 = vector.shape_cast %127 : vector<8xf32> to vector<8x1xf32>
    %129 = vector.broadcast %128 : vector<8x1xf32> to vector<8x8xf32>
    %130 = arith.subf %126, %129 : vector<8x8xf32>
    %131 = math.exp %130 : vector<8x8xf32>
    %cst_42 = arith.constant dense<0.000000e+00> : vector<8xf32>
    %132 = vector.multi_reduction <add>, %131, %cst_42 [1] : vector<8x8xf32> to vector<8xf32>
    %133 = vector.shape_cast %132 : vector<8xf32> to vector<8x1xf32>
    %134 = tpu.reciprocal %133 {approx = true} : vector<8x1xf32> -> vector<8x1xf32>
    %135 = vector.broadcast %134 : vector<8x1xf32> to vector<8x8xf32>
    %136 = arith.mulf %131, %135 : vector<8x8xf32>
    %cst_43 = arith.constant dense<0.000000e+00> : vector<8x4xf32>
    %137 = tpu.matmul %136, %121, %cst_43 {dimension_numbers = #tpu.dot_dimension_numbers<[1], [0], [0], [1], [0, 0, 1, 1], [], []>} : vector<8x8xf32>, vector<8x4xf32>, vector<8x4xf32> -> vector<8x4xf32>
    %138 = vector.extract_strided_slice %16 {offsets = [0, 24], sizes = [8, 4], strides = [1, 1]} : vector<8x96xf32> to vector<8x4xf32>
    %139 = vector.extract_strided_slice %16 {offsets = [0, 56], sizes = [8, 4], strides = [1, 1]} : vector<8x96xf32> to vector<8x4xf32>
    %140 = vector.extract_strided_slice %16 {offsets = [0, 88], sizes = [8, 4], strides = [1, 1]} : vector<8x96xf32> to vector<8x4xf32>
    %cst_44 = arith.constant dense<0.000000e+00> : vector<8x8xf32>
    %141 = tpu.matmul %138, %139, %cst_44 {dimension_numbers = #tpu.dot_dimension_numbers<[1], [1], [0], [0], [0, 0, 1, 0], [], []>} : vector<8x4xf32>, vector<8x4xf32>, vector<8x8xf32> -> vector<8x8xf32>
    %cst_45 = arith.constant 5.000000e-01 : f32
    %142 = vector.broadcast %cst_45 : f32 to vector<8x8xf32>
    %143 = arith.mulf %141, %142 : vector<8x8xf32>
    %144 = vector.broadcast %23 : vector<1x8xf32> to vector<8x8xf32>
    %145 = arith.addf %143, %144 : vector<8x8xf32>
    %cst_46 = arith.constant dense<0xFF800000> : vector<8xf32>
    %146 = vector.multi_reduction <maximumf>, %145, %cst_46 [1] : vector<8x8xf32> to vector<8xf32>
    %147 = vector.shape_cast %146 : vector<8xf32> to vector<8x1xf32>
    %148 = vector.broadcast %147 : vector<8x1xf32> to vector<8x8xf32>
    %149 = arith.subf %145, %148 : vector<8x8xf32>
    %150 = math.exp %149 : vector<8x8xf32>
    %cst_47 = arith.constant dense<0.000000e+00> : vector<8xf32>
    %151 = vector.multi_reduction <add>, %150, %cst_47 [1] : vector<8x8xf32> to vector<8xf32>
    %152 = vector.shape_cast %151 : vector<8xf32> to vector<8x1xf32>
    %153 = tpu.reciprocal %152 {approx = true} : vector<8x1xf32> -> vector<8x1xf32>
    %154 = vector.broadcast %153 : vector<8x1xf32> to vector<8x8xf32>
    %155 = arith.mulf %150, %154 : vector<8x8xf32>
    %cst_48 = arith.constant dense<0.000000e+00> : vector<8x4xf32>
    %156 = tpu.matmul %155, %140, %cst_48 {dimension_numbers = #tpu.dot_dimension_numbers<[1], [0], [0], [1], [0, 0, 1, 1], [], []>} : vector<8x8xf32>, vector<8x4xf32>, vector<8x4xf32> -> vector<8x4xf32>
    %157 = vector.extract_strided_slice %16 {offsets = [0, 28], sizes = [8, 4], strides = [1, 1]} : vector<8x96xf32> to vector<8x4xf32>
    %158 = vector.extract_strided_slice %16 {offsets = [0, 60], sizes = [8, 4], strides = [1, 1]} : vector<8x96xf32> to vector<8x4xf32>
    %159 = vector.extract_strided_slice %16 {offsets = [0, 92], sizes = [8, 4], strides = [1, 1]} : vector<8x96xf32> to vector<8x4xf32>
    %cst_49 = arith.constant dense<0.000000e+00> : vector<8x8xf32>
    %160 = tpu.matmul %157, %158, %cst_49 {dimension_numbers = #tpu.dot_dimension_numbers<[1], [1], [0], [0], [0, 0, 1, 0], [], []>} : vector<8x4xf32>, vector<8x4xf32>, vector<8x8xf32> -> vector<8x8xf32>
    %cst_50 = arith.constant 5.000000e-01 : f32
    %161 = vector.broadcast %cst_50 : f32 to vector<8x8xf32>
    %162 = arith.mulf %160, %161 : vector<8x8xf32>
    %163 = vector.broadcast %23 : vector<1x8xf32> to vector<8x8xf32>
    %164 = arith.addf %162, %163 : vector<8x8xf32>
    %cst_51 = arith.constant dense<0xFF800000> : vector<8xf32>
    %165 = vector.multi_reduction <maximumf>, %164, %cst_51 [1] : vector<8x8xf32> to vector<8xf32>
    %166 = vector.shape_cast %165 : vector<8xf32> to vector<8x1xf32>
    %167 = vector.broadcast %166 : vector<8x1xf32> to vector<8x8xf32>
    %168 = arith.subf %164, %167 : vector<8x8xf32>
    %169 = math.exp %168 : vector<8x8xf32>
    %cst_52 = arith.constant dense<0.000000e+00> : vector<8xf32>
    %170 = vector.multi_reduction <add>, %169, %cst_52 [1] : vector<8x8xf32> to vector<8xf32>
    %171 = vector.shape_cast %170 : vector<8xf32> to vector<8x1xf32>
    %172 = tpu.reciprocal %171 {approx = true} : vector<8x1xf32> -> vector<8x1xf32>
    %173 = vector.broadcast %172 : vector<8x1xf32> to vector<8x8xf32>
    %174 = arith.mulf %169, %173 : vector<8x8xf32>
    %cst_53 = arith.constant dense<0.000000e+00> : vector<8x4xf32>
    %175 = tpu.matmul %174, %159, %cst_53 {dimension_numbers = #tpu.dot_dimension_numbers<[1], [0], [0], [1], [0, 0, 1, 1], [], []>} : vector<8x8xf32>, vector<8x4xf32>, vector<8x4xf32> -> vector<8x4xf32>
    %176 = tpu.concatenate %42, %61, %80, %99, %118, %137, %156, %175 in 1 : vector<8x4xf32>, vector<8x4xf32>, vector<8x4xf32>, vector<8x4xf32>, vector<8x4xf32>, vector<8x4xf32>, vector<8x4xf32>, vector<8x4xf32> -> vector<8x32xf32>
    %177 = arith.truncf %176 : vector<8x32xf32> to vector<8x32xbf16>
    %c0_54 = arith.constant 0 : index
    %c0_55 = arith.constant 0 : index
    %178 = vector.load %arg5[%c0_54, %c0_55] : memref<32x32xbf16, #tpu.memory_space<vmem>>, vector<32x32xbf16>
    %cst_56 = arith.constant dense<0.000000e+00> : vector<8x32xf32>
    %179 = tpu.matmul %177, %178, %cst_56 {dimension_numbers = #tpu.dot_dimension_numbers<[1], [0], [0], [1], [0, 0, 1, 1], [], []>} : vector<8x32xbf16>, vector<32x32xbf16>, vector<8x32xf32> -> vector<8x32xf32>
    %180 = vector.broadcast %9 : vector<1x32xf32> to vector<8x32xf32>
    %181 = arith.addf %179, %180 : vector<8x32xf32>
    %182 = arith.addf %1, %181 : vector<8x32xf32>
    %cst_57 = arith.constant dense<0.000000e+00> : vector<8xf32>
    %183 = vector.multi_reduction <add>, %182, %cst_57 [1] : vector<8x32xf32> to vector<8xf32>
    %184 = vector.shape_cast %183 : vector<8xf32> to vector<8x1xf32>
    %cst_58 = arith.constant 3.200000e+01 : f32
    %185 = vector.broadcast %cst_58 : f32 to vector<8x1xf32>
    %186 = arith.divf %184, %185 : vector<8x1xf32>
    %187 = vector.broadcast %186 : vector<8x1xf32> to vector<8x32xf32>
    %188 = arith.subf %182, %187 : vector<8x32xf32>
    %189 = arith.mulf %188, %188 : vector<8x32xf32>
    %cst_59 = arith.constant dense<0.000000e+00> : vector<8xf32>
    %190 = vector.multi_reduction <add>, %189, %cst_59 [1] : vector<8x32xf32> to vector<8xf32>
    %191 = vector.shape_cast %190 : vector<8xf32> to vector<8x1xf32>
    %cst_60 = arith.constant 3.200000e+01 : f32
    %192 = vector.broadcast %cst_60 : f32 to vector<8x1xf32>
    %193 = arith.divf %191, %192 : vector<8x1xf32>
    %194 = vector.broadcast %186 : vector<8x1xf32> to vector<8x32xf32>
    %195 = arith.subf %182, %194 : vector<8x32xf32>
    %cst_61 = arith.constant 9.99999974E-6 : f32
    %196 = vector.broadcast %cst_61 : f32 to vector<8x1xf32>
    %197 = arith.addf %193, %196 : vector<8x1xf32>
    %198 = math.rsqrt %197 : vector<8x1xf32>
    %199 = vector.broadcast %198 : vector<8x1xf32> to vector<8x32xf32>
    %200 = arith.mulf %195, %199 : vector<8x32xf32>
    %201 = vector.broadcast %3 : vector<1x32xf32> to vector<8x32xf32>
    %202 = arith.mulf %200, %201 : vector<8x32xf32>
    %203 = vector.broadcast %4 : vector<1x32xf32> to vector<8x32xf32>
    %204 = arith.addf %202, %203 : vector<8x32xf32>
    %205 = arith.truncf %204 : vector<8x32xf32> to vector<8x32xbf16>
    %c0_62 = arith.constant 0 : index
    %c0_63 = arith.constant 0 : index
    %206 = vector.load %arg7[%c0_62, %c0_63] : memref<32x128xbf16, #tpu.memory_space<vmem>>, vector<32x128xbf16>
    %cst_64 = arith.constant dense<0.000000e+00> : vector<8x128xf32>
    %207 = tpu.matmul %205, %206, %cst_64 {dimension_numbers = #tpu.dot_dimension_numbers<[1], [0], [0], [1], [0, 0, 1, 1], [], []>} : vector<8x32xbf16>, vector<32x128xbf16>, vector<8x128xf32> -> vector<8x128xf32>
    %c0_65 = arith.constant 0 : index
    %c0_66 = arith.constant 0 : index
    %208 = vector.load %arg8[%c0_65, %c0_66] : memref<1x128xf32, #tpu.memory_space<vmem>>, vector<1x128xf32>
    %209 = vector.broadcast %208 : vector<1x128xf32> to vector<8x128xf32>
    %210 = arith.addf %207, %209 : vector<8x128xf32>
    %cst_67 = arith.constant 0.000000e+00 : f32
    %211 = vector.broadcast %cst_67 : f32 to vector<8x128xf32>
    %212 = arith.maximumf %210, %211 : vector<8x128xf32>
    %213 = arith.truncf %212 : vector<8x128xf32> to vector<8x128xbf16>
    %c0_68 = arith.constant 0 : index
    %c0_69 = arith.constant 0 : index
    %214 = vector.load %arg9[%c0_68, %c0_69] : memref<128x32xbf16, #tpu.memory_space<vmem>>, vector<128x32xbf16>
    %cst_70 = arith.constant dense<0.000000e+00> : vector<8x32xf32>
    %215 = tpu.matmul %213, %214, %cst_70 {dimension_numbers = #tpu.dot_dimension_numbers<[1], [0], [0], [1], [0, 0, 1, 1], [], []>} : vector<8x128xbf16>, vector<128x32xbf16>, vector<8x32xf32> -> vector<8x32xf32>
    %216 = vector.broadcast %10 : vector<1x32xf32> to vector<8x32xf32>
    %217 = arith.addf %215, %216 : vector<8x32xf32>
    %218 = arith.addf %204, %217 : vector<8x32xf32>
    %cst_71 = arith.constant dense<0.000000e+00> : vector<8xf32>
    %219 = vector.multi_reduction <add>, %218, %cst_71 [1] : vector<8x32xf32> to vector<8xf32>
    %220 = vector.shape_cast %219 : vector<8xf32> to vector<8x1xf32>
    %cst_72 = arith.constant 3.200000e+01 : f32
    %221 = vector.broadcast %cst_72 : f32 to vector<8x1xf32>
    %222 = arith.divf %220, %221 : vector<8x1xf32>
    %223 = vector.broadcast %222 : vector<8x1xf32> to vector<8x32xf32>
    %224 = arith.subf %218, %223 : vector<8x32xf32>
    %225 = arith.mulf %224, %224 : vector<8x32xf32>
    %cst_73 = arith.constant dense<0.000000e+00> : vector<8xf32>
    %226 = vector.multi_reduction <add>, %225, %cst_73 [1] : vector<8x32xf32> to vector<8xf32>
    %227 = vector.shape_cast %226 : vector<8xf32> to vector<8x1xf32>
    %cst_74 = arith.constant 3.200000e+01 : f32
    %228 = vector.broadcast %cst_74 : f32 to vector<8x1xf32>
    %229 = arith.divf %227, %228 : vector<8x1xf32>
    %230 = vector.broadcast %222 : vector<8x1xf32> to vector<8x32xf32>
    %231 = arith.subf %218, %230 : vector<8x32xf32>
    %cst_75 = arith.constant 9.99999974E-6 : f32
    %232 = vector.broadcast %cst_75 : f32 to vector<8x1xf32>
    %233 = arith.addf %229, %232 : vector<8x1xf32>
    %234 = math.rsqrt %233 : vector<8x1xf32>
    %235 = vector.broadcast %234 : vector<8x1xf32> to vector<8x32xf32>
    %236 = arith.mulf %231, %235 : vector<8x32xf32>
    %237 = vector.broadcast %5 : vector<1x32xf32> to vector<8x32xf32>
    %238 = arith.mulf %236, %237 : vector<8x32xf32>
    %239 = vector.broadcast %6 : vector<1x32xf32> to vector<8x32xf32>
    %240 = arith.addf %238, %239 : vector<8x32xf32>
    %241 = vector.extract_strided_slice %240 {offsets = [7, 0], sizes = [1, 32], strides = [1, 1]} : vector<8x32xf32> to vector<1x32xf32>
    %cst_76 = arith.constant dense<0.000000e+00> : vector<1xf32>
    %242 = vector.multi_reduction <add>, %241, %cst_76 [1] : vector<1x32xf32> to vector<1xf32>
    %243 = vector.shape_cast %242 : vector<1xf32> to vector<1x1xf32>
    %cst_77 = arith.constant 3.200000e+01 : f32
    %244 = vector.broadcast %cst_77 : f32 to vector<1x1xf32>
    %245 = arith.divf %243, %244 : vector<1x1xf32>
    %246 = vector.broadcast %245 : vector<1x1xf32> to vector<1x32xf32>
    %247 = arith.subf %241, %246 : vector<1x32xf32>
    %248 = arith.mulf %247, %247 : vector<1x32xf32>
    %cst_78 = arith.constant dense<0.000000e+00> : vector<1xf32>
    %249 = vector.multi_reduction <add>, %248, %cst_78 [1] : vector<1x32xf32> to vector<1xf32>
    %250 = vector.shape_cast %249 : vector<1xf32> to vector<1x1xf32>
    %cst_79 = arith.constant 3.200000e+01 : f32
    %251 = vector.broadcast %cst_79 : f32 to vector<1x1xf32>
    %252 = arith.divf %250, %251 : vector<1x1xf32>
    %253 = vector.broadcast %245 : vector<1x1xf32> to vector<1x32xf32>
    %254 = arith.subf %241, %253 : vector<1x32xf32>
    %cst_80 = arith.constant 9.99999974E-6 : f32
    %255 = vector.broadcast %cst_80 : f32 to vector<1x1xf32>
    %256 = arith.addf %252, %255 : vector<1x1xf32>
    %257 = math.rsqrt %256 : vector<1x1xf32>
    %258 = vector.broadcast %257 : vector<1x1xf32> to vector<1x32xf32>
    %259 = arith.mulf %254, %258 : vector<1x32xf32>
    %260 = arith.mulf %259, %7 : vector<1x32xf32>
    %261 = arith.addf %260, %8 : vector<1x32xf32>
    %262 = arith.truncf %261 : vector<1x32xf32> to vector<1x32xbf16>
    %c0_81 = arith.constant 0 : index
    %c0_82 = arith.constant 0 : index
    %263 = vector.load %arg10[%c0_81, %c0_82] : memref<32x128xbf16, #tpu.memory_space<vmem>>, vector<32x128xbf16>
    %cst_83 = arith.constant dense<0.000000e+00> : vector<1x128xf32>
    %264 = tpu.matmul %262, %263, %cst_83 {dimension_numbers = #tpu.dot_dimension_numbers<[1], [0], [0], [1], [0, 0, 1, 1], [], []>} : vector<1x32xbf16>, vector<32x128xbf16>, vector<1x128xf32> -> vector<1x128xf32>
    %c0_84 = arith.constant 0 : index
    %c0_85 = arith.constant 0 : index
    %265 = vector.load %arg11[%c0_84, %c0_85] : memref<1x128xf32, #tpu.memory_space<vmem>>, vector<1x128xf32>
    %266 = arith.addf %264, %265 : vector<1x128xf32>
    %cst_86 = arith.constant dense<0xFF800000> : vector<1xf32>
    %267 = vector.multi_reduction <maximumf>, %266, %cst_86 [1] : vector<1x128xf32> to vector<1xf32>
    %268 = vector.shape_cast %267 : vector<1xf32> to vector<1x1xf32>
    %269 = vector.broadcast %268 : vector<1x1xf32> to vector<1x128xf32>
    %270 = arith.subf %266, %269 : vector<1x128xf32>
    %271 = math.exp %270 : vector<1x128xf32>
    %cst_87 = arith.constant dense<0.000000e+00> : vector<1xf32>
    %272 = vector.multi_reduction <add>, %271, %cst_87 [1] : vector<1x128xf32> to vector<1xf32>
    %273 = vector.shape_cast %272 : vector<1xf32> to vector<1x1xf32>
    %274 = tpu.reciprocal %273 {approx = true} : vector<1x1xf32> -> vector<1x1xf32>
    %275 = vector.broadcast %274 : vector<1x1xf32> to vector<1x128xf32>
    %276 = arith.mulf %271, %275 : vector<1x128xf32>
    %277 = vector.shape_cast %276 : vector<1x128xf32> to vector<1x1x128xf32>
    %c0_88 = arith.constant 0 : index
    %c0_89 = arith.constant 0 : index
    %c0_90 = arith.constant 0 : index
    %278 = vector.load %arg12[%c0_88, %c0_89, %c0_90] : memref<1x1x128xf32, #tpu.memory_space<vmem>>, vector<1x1x128xf32>
    tpu.vector_store %arg12[%c0_88, %c0_89, %c0_90], %277 {strides = array<i32>} : memref<1x1x128xf32, #tpu.memory_space<vmem>>, vector<1x1x128xf32>,
    return
  }
  func.func @transform_0(%arg0: i32) -> (i32, i32, i32) {
    %c0_i32 = arith.constant 0 : i32
    %c0_i32_0 = arith.constant 0 : i32
    %c0_i32_1 = arith.constant 0 : i32
    return %arg0, %c0_i32, %c0_i32_0 : i32, i32, i32
  }
  func.func @transform_1(%arg0: i32) -> (i32, i32, i32) {
    %c0_i32 = arith.constant 0 : i32
    %c0_i32_0 = arith.constant 0 : i32
    %c0_i32_1 = arith.constant 0 : i32
    return %arg0, %c0_i32, %c0_i32_0 : i32, i32, i32
  }
  func.func @transform_2(%arg0: i32) -> (i32, i32) {
    %c0_i32 = arith.constant 0 : i32
    %c0_i32_0 = arith.constant 0 : i32
    %c0_i32_1 = arith.constant 0 : i32
    return %c0_i32, %c0_i32_0 : i32, i32
  }
  func.func @transform_3(%arg0: i32) -> (i32, i32) {
    %c0_i32 = arith.constant 0 : i32
    %c0_i32_0 = arith.constant 0 : i32
    %c0_i32_1 = arith.constant 0 : i32
    return %c0_i32, %c0_i32_0 : i32, i32
  }
  func.func @transform_4(%arg0: i32) -> (i32, i32) {
    %c0_i32 = arith.constant 0 : i32
    %c0_i32_0 = arith.constant 0 : i32
    %c0_i32_1 = arith.constant 0 : i32
    return %c0_i32, %c0_i32_0 : i32, i32
  }
  func.func @transform_5(%arg0: i32) -> (i32, i32) {
    %c0_i32 = arith.constant 0 : i32
    %c0_i32_0 = arith.constant 0 : i32
    %c0_i32_1 = arith.constant 0 : i32
    return %c0_i32, %c0_i32_0 : i32, i32
  }
  func.func @transform_6(%arg0: i32) -> (i32, i32) {
    %c0_i32 = arith.constant 0 : i32
    %c0_i32_0 = arith.constant 0 : i32
    %c0_i32_1 = arith.constant 0 : i32
    return %c0_i32, %c0_i32_0 : i32, i32
  }
  func.func @transform_7(%arg0: i32) -> (i32, i32) {
    %c0_i32 = arith.constant 0 : i32
    %c0_i32_0 = arith.constant 0 : i32
    %c0_i32_1 = arith.constant 0 : i32
    return %c0_i32, %c0_i32_0 : i32, i32
  }
  func.func @transform_8(%arg0: i32) -> (i32, i32) {
    %c0_i32 = arith.constant 0 : i32
    %c0_i32_0 = arith.constant 0 : i32
    %c0_i32_1 = arith.constant 0 : i32
    return %c0_i32, %c0_i32_0 : i32, i32
  }
  func.func @transform_9(%arg0: i32) -> (i32, i32) {
    %c0_i32 = arith.constant 0 : i32
    %c0_i32_0 = arith.constant 0 : i32
    %c0_i32_1 = arith.constant 0 : i32
    return %c0_i32, %c0_i32_0 : i32, i32
  }
  func.func @transform_10(%arg0: i32) -> (i32, i32) {
    %c0_i32 = arith.constant 0 : i32
    %c0_i32_0 = arith.constant 0 : i32
    %c0_i32_1 = arith.constant 0 : i32
    return %c0_i32, %c0_i32_0 : i32, i32
  }
  func.func @transform_11(%arg0: i32) -> (i32, i32, i32) {
    %c0_i32 = arith.constant 0 : i32
    %c0_i32_0 = arith.constant 0 : i32
    %c0_i32_1 = arith.constant 0 : i32
    return %arg0, %c0_i32, %c0_i32_0 : i32, i32, i32
  }
}

</mosaic_0001>

<llo_original>
// kernel: tpu_custom_call.1
$region0: #{tpu_custom_call.1}
  #allocation0 [shape = 'u32[]', space=smem, size = 0x4, offset = 0x4, fixed_abs, tag = 'smem constant byte address 0x4 - core index']
  #allocation1 [shape = 'u32[144,128]{1,0:T(1,128)}', space=vmem, size = 0x12000, scoped, tag = 'internal scratch']
  %s0 = inlined_call_operand.vmem [shape: f32[2,8,32], index: 0, kind: input, shape index: {}]
  %s1 = inlined_call_operand.hbm [shape: f32[2,1,8], index: 1, kind: input, shape index: {}]
  %s2 = inlined_call_operand.vmem [shape: bf16[32,96], index: 2, kind: input, shape index: {}]
  %s3 = inlined_call_operand.vmem [shape: f32[1,96], index: 3, kind: input, shape index: {}]
  %s4 = inlined_call_operand.vmem [shape: bf16[32,32], index: 4, kind: input, shape index: {}]
  %s5 = inlined_call_operand.vmem [shape: f32[8,32], index: 5, kind: input, shape index: {}]
  %s6 = inlined_call_operand.vmem [shape: bf16[32,128], index: 6, kind: input, shape index: {}]
  %s7 = inlined_call_operand.vmem [shape: f32[1,128], index: 7, kind: input, shape index: {}]
  %s8 = inlined_call_operand.vmem [shape: bf16[128,32], index: 8, kind: input, shape index: {}]
  %s9 = inlined_call_operand.vmem [shape: bf16[32,128], index: 9, kind: input, shape index: {}]
  %s10 = inlined_call_operand.vmem [shape: f32[1,128], index: 10, kind: input, shape index: {}]
  %s11 = inlined_call_operand.hbm [shape: f32[2,1,128], index: 11, kind: output, shape index: {}]
  %s12 = sld [smem:[#allocation0]]
  $region81: #{tpu_custom_call.1} parent=0
    _
  %s14 = ssub.s32 1, %s12
  %s15 = scalar_select 0, %s14, %s12
  $region1: #{tpu_custom_call.1} parent=0
    #allocation2 [shape = 'u8[1024]{0}', space=vmem, size = 0x400, scoped, tag = 'input window, operand 1']
    #allocation3 [shape = 's32[2]{0}', space=sflag, size = 0x8, scoped, tag = 'scoped memory for tpu_custom_call.1']
    #allocation4 [shape = 's32[2]{0}', space=sflag, size = 0x8, scoped, tag = 'scoped memory for tpu_custom_call.1']
    #allocation5 [shape = 'u8[1024]{0}', space=vmem, size = 0x400, scoped, tag = 'output window, operand 0']
    %16 = vsyncpa [#allocation3], 0
    %s17 = scalar_lea.sflag [#allocation3], 1
    %18 = vsyncpa %s17, 0
    %19 = vsyncpa [#allocation4], 0
    %s20 = scalar_lea.sflag [#allocation4], 1
    %21 = vsyncpa %s20, 0
    loop: start=0, step=1, limit=4
    $region2: #{tpu_custom_call.1} parent=1 // loop_pre_header
      _
    $region3: #{tpu_custom_call.1} parent=1 // loop_header
      %s23 = sphi 0, %s27
      %p24 = scmp.ge.s32.totalorder %s23, 4
      %s33 = sphi 0, %s35
      %s36 = sphi 0, %s33
      %s37 = sphi 0, %s36
      %s53 = sphi 0, %s37
      %s59 = sphi 0, %s61
      %s62 = sphi 0, %s59
      %s63 = sphi 0, %s62
      %s79 = sphi 0, %s63
      %s83 = sphi 0, %s83
      %s85 = sphi 0, %s83
      %s86 = sphi 0, %s85
      %s100 = sphi 0, %s86
      %s104 = sphi 0, %s104
      %s106 = sphi 0, %s104
      %s107 = sphi 0, %s106
      %s121 = sphi 0, %s107
      %s125 = sphi 0, %s125
      %s127 = sphi 0, %s125
      %s128 = sphi 0, %s127
      %s142 = sphi 0, %s128
      %s146 = sphi 0, %s146
      %s148 = sphi 0, %s146
      %s149 = sphi 0, %s148
      %s163 = sphi 0, %s149
      %s167 = sphi 0, %s167
      %s169 = sphi 0, %s167
      %s170 = sphi 0, %s169
      %s184 = sphi 0, %s170
      %s188 = sphi 0, %s188
      %s190 = sphi 0, %s188
      %s191 = sphi 0, %s190
      %s205 = sphi 0, %s191
      %s209 = sphi 0, %s209
      %s211 = sphi 0, %s209
      %s212 = sphi 0, %s211
      %s226 = sphi 0, %s212
      %s230 = sphi 0, %s230
      %s232 = sphi 0, %s230
      %s233 = sphi 0, %s232
      %s247 = sphi 0, %s233
      %s251 = sphi 0, %s251
      %s253 = sphi 0, %s251
      %s254 = sphi 0, %s253
      %s268 = sphi 0, %s254
      %s274 = sphi 0, %s276
      %s277 = sphi 0, %s274
      %s278 = sphi 0, %s277
      %s294 = sphi 0, %s278
    $region4: #{tpu_custom_call.1} parent=1 // loop_header_branch
      %26 = sbr.rel (%p24) target = $region8
    $region5: #{tpu_custom_call.1} parent=1 // loop_body
      %s28 = ssub.s32 %s23, 1
      %s29 = ssub.s32 %s23, 2
      %s30 = sadd.s32 %s23, 1
      %s31 = ssub.s32 %s23, %s30
      %p32 = scmp.eq.s32.totalorder %s31, 0
      %s34 = sadd.s32 %s33, 1
      %s35 = scalar_select %p32, %s33, %s34
      %p38 = pneg %p32
      %p39 = scmp.eq.s32.totalorder %s23, 1
      %p40 = por %p38, %p39
      %p41 = scmp.ne.s32.totalorder %s33, %s36
      %p42 = scmp.eq.s32.totalorder %s23, 0
      %p43 = por %p41, %p42
      %p44 = scmp.ne.s32.totalorder %s33, %s36
      %p45 = scmp.eq.s32.totalorder %s28, 1
      %p46 = por %p44, %p45
      %p47 = scmp.ne.s32.totalorder %s36, %s37
      %p48 = scmp.eq.s32.totalorder %s28, 0
      %p49 = por %p47, %p48
      %p50 = scmp.ne.s32.totalorder %s36, %s37
      %p51 = scmp.eq.s32.totalorder %s29, 1
      %p52 = por %p50, %p51
      %p54 = scmp.ne.s32.totalorder %s37, %s53
      %p55 = scmp.eq.s32.totalorder %s29, 0
      %p56 = por %p54, %p55
      %s57 = ssub.s32 %s23, %s30
      %p58 = scmp.eq.s32.totalorder %s57, 0
      %s60 = sadd.s32 %s59, 1
      %s61 = scalar_select %p58, %s59, %s60
      %p64 = pneg %p58
      %p65 = scmp.eq.s32.totalorder %s23, 1
      %p66 = por %p64, %p65
      %p67 = scmp.ne.s32.totalorder %s59, %s62
      %p68 = scmp.eq.s32.totalorder %s23, 0
      %p69 = por %p67, %p68
      %p70 = scmp.ne.s32.totalorder %s59, %s62
      %p71 = scmp.eq.s32.totalorder %s28, 1
      %p72 = por %p70, %p71
      %p73 = scmp.ne.s32.totalorder %s62, %s63
      %p74 = scmp.eq.s32.totalorder %s28, 0
      %p75 = por %p73, %p74
      %p76 = scmp.ne.s32.totalorder %s62, %s63
      %p77 = scmp.eq.s32.totalorder %s29, 1
      %p78 = por %p76, %p77
      %p80 = scmp.ne.s32.totalorder %s63, %s79
      %p81 = scmp.eq.s32.totalorder %s29, 0
      %p82 = por %p80, %p81
      %s84 = sadd.s32 %s83, 1
      %p87 = scmp.eq.s32.totalorder %s23, 1
      %p88 = scmp.ne.s32.totalorder %s83, %s85
      %p89 = scmp.eq.s32.totalorder %s23, 0
      %p90 = por %p88, %p89
      %p91 = scmp.ne.s32.totalorder %s83, %s85
      %p92 = scmp.eq.s32.totalorder %s28, 1
      %p93 = por %p91, %p92
      %p94 = scmp.ne.s32.totalorder %s85, %s86
      %p95 = scmp.eq.s32.totalorder %s28, 0
      %p96 = por %p94, %p95
      %p97 = scmp.ne.s32.totalorder %s85, %s86
      %p98 = scmp.eq.s32.totalorder %s29, 1
      %p99 = por %p97, %p98
      %p101 = scmp.ne.s32.totalorder %s86, %s100
      %p102 = scmp.eq.s32.totalorder %s29, 0
      %p103 = por %p101, %p102
      %s105 = sadd.s32 %s104, 1
      %p108 = scmp.eq.s32.totalorder %s23, 1
      %p109 = scmp.ne.s32.totalorder %s104, %s106
      %p110 = scmp.eq.s32.totalorder %s23, 0
      %p111 = por %p109, %p110
      %p112 = scmp.ne.s32.totalorder %s104, %s106
      %p113 = scmp.eq.s32.totalorder %s28, 1
      %p114 = por %p112, %p113
      %p115 = scmp.ne.s32.totalorder %s106, %s107
      %p116 = scmp.eq.s32.totalorder %s28, 0
      %p117 = por %p115, %p116
      %p118 = scmp.ne.s32.totalorder %s106, %s107
      %p119 = scmp.eq.s32.totalorder %s29, 1
      %p120 = por %p118, %p119
      %p122 = scmp.ne.s32.totalorder %s107, %s121
      %p123 = scmp.eq.s32.totalorder %s29, 0
      %p124 = por %p122, %p123
      %s126 = sadd.s32 %s125, 1
      %p129 = scmp.eq.s32.totalorder %s23, 1
      %p130 = scmp.ne.s32.totalorder %s125, %s127
      %p131 = scmp.eq.s32.totalorder %s23, 0
      %p132 = por %p130, %p131
      %p133 = scmp.ne.s32.totalorder %s125, %s127
      %p134 = scmp.eq.s32.totalorder %s28, 1
      %p135 = por %p133, %p134
      %p136 = scmp.ne.s32.totalorder %s127, %s128
      %p137 = scmp.eq.s32.totalorder %s28, 0
      %p138 = por %p136, %p137
      %p139 = scmp.ne.s32.totalorder %s127, %s128
      %p140 = scmp.eq.s32.totalorder %s29, 1
      %p141 = por %p139, %p140
      %p143 = scmp.ne.s32.totalorder %s128, %s142
      %p144 = scmp.eq.s32.totalorder %s29, 0
      %p145 = por %p143, %p144
      %s147 = sadd.s32 %s146, 1
      %p150 = scmp.eq.s32.totalorder %s23, 1
      %p151 = scmp.ne.s32.totalorder %s146, %s148
      %p152 = scmp.eq.s32.totalorder %s23, 0
      %p153 = por %p151, %p152
      %p154 = scmp.ne.s32.totalorder %s146, %s148
      %p155 = scmp.eq.s32.totalorder %s28, 1
      %p156 = por %p154, %p155
      %p157 = scmp.ne.s32.totalorder %s148, %s149
      %p158 = scmp.eq.s32.totalorder %s28, 0
      %p159 = por %p157, %p158
      %p160 = scmp.ne.s32.totalorder %s148, %s149
      %p161 = scmp.eq.s32.totalorder %s29, 1
      %p162 = por %p160, %p161
      %p164 = scmp.ne.s32.totalorder %s149, %s163
      %p165 = scmp.eq.s32.totalorder %s29, 0
      %p166 = por %p164, %p165
      %s168 = sadd.s32 %s167, 1
      %p171 = scmp.eq.s32.totalorder %s23, 1
      %p172 = scmp.ne.s32.totalorder %s167, %s169
      %p173 = scmp.eq.s32.totalorder %s23, 0
      %p174 = por %p172, %p173
      %p175 = scmp.ne.s32.totalorder %s167, %s169
      %p176 = scmp.eq.s32.totalorder %s28, 1
      %p177 = por %p175, %p176
      %p178 = scmp.ne.s32.totalorder %s169, %s170
      %p179 = scmp.eq.s32.totalorder %s28, 0
      %p180 = por %p178, %p179
      %p181 = scmp.ne.s32.totalorder %s169, %s170
      %p182 = scmp.eq.s32.totalorder %s29, 1
      %p183 = por %p181, %p182
      %p185 = scmp.ne.s32.totalorder %s170, %s184
      %p186 = scmp.eq.s32.totalorder %s29, 0
      %p187 = por %p185, %p186
      %s189 = sadd.s32 %s188, 1
      %p192 = scmp.eq.s32.totalorder %s23, 1
      %p193 = scmp.ne.s32.totalorder %s188, %s190
      %p194 = scmp.eq.s32.totalorder %s23, 0
      %p195 = por %p193, %p194
      %p196 = scmp.ne.s32.totalorder %s188, %s190
      %p197 = scmp.eq.s32.totalorder %s28, 1
      %p198 = por %p196, %p197
      %p199 = scmp.ne.s32.totalorder %s190, %s191
      %p200 = scmp.eq.s32.totalorder %s28, 0
      %p201 = por %p199, %p200
      %p202 = scmp.ne.s32.totalorder %s190, %s191
      %p203 = scmp.eq.s32.totalorder %s29, 1
      %p204 = por %p202, %p203
      %p206 = scmp.ne.s32.totalorder %s191, %s205
      %p207 = scmp.eq.s32.totalorder %s29, 0
      %p208 = por %p206, %p207
      %s210 = sadd.s32 %s209, 1
      %p213 = scmp.eq.s32.totalorder %s23, 1
      %p214 = scmp.ne.s32.totalorder %s209, %s211
      %p215 = scmp.eq.s32.totalorder %s23, 0
      %p216 = por %p214, %p215
      %p217 = scmp.ne.s32.totalorder %s209, %s211
      %p218 = scmp.eq.s32.totalorder %s28, 1
      %p219 = por %p217, %p218
      %p220 = scmp.ne.s32.totalorder %s211, %s212
      %p221 = scmp.eq.s32.totalorder %s28, 0
      %p222 = por %p220, %p221
      %p223 = scmp.ne.s32.totalorder %s211, %s212
      %p224 = scmp.eq.s32.totalorder %s29, 1
      %p225 = por %p223, %p224
      %p227 = scmp.ne.s32.totalorder %s212, %s226
      %p228 = scmp.eq.s32.totalorder %s29, 0
      %p229 = por %p227, %p228
      %s231 = sadd.s32 %s230, 1
      %p234 = scmp.eq.s32.totalorder %s23, 1
      %p235 = scmp.ne.s32.totalorder %s230, %s232
      %p236 = scmp.eq.s32.totalorder %s23, 0
      %p237 = por %p235, %p236
      %p238 = scmp.ne.s32.totalorder %s230, %s232
      %p239 = scmp.eq.s32.totalorder %s28, 1
      %p240 = por %p238, %p239
      %p241 = scmp.ne.s32.totalorder %s232, %s233
      %p242 = scmp.eq.s32.totalorder %s28, 0
      %p243 = por %p241, %p242
      %p244 = scmp.ne.s32.totalorder %s232, %s233
      %p245 = scmp.eq.s32.totalorder %s29, 1
      %p246 = por %p244, %p245
      %p248 = scmp.ne.s32.totalorder %s233, %s247
      %p249 = scmp.eq.s32.totalorder %s29, 0
      %p250 = por %p248, %p249
      %s252 = sadd.s32 %s251, 1
      %p255 = scmp.eq.s32.totalorder %s23, 1
      %p256 = scmp.ne.s32.totalorder %s251, %s253
      %p257 = scmp.eq.s32.totalorder %s23, 0
      %p258 = por %p256, %p257
      %p259 = scmp.ne.s32.totalorder %s251, %s253
      %p260 = scmp.eq.s32.totalorder %s28, 1
      %p261 = por %p259, %p260
      %p262 = scmp.ne.s32.totalorder %s253, %s254
      %p263 = scmp.eq.s32.totalorder %s28, 0
      %p264 = por %p262, %p263
      %p265 = scmp.ne.s32.totalorder %s253, %s254
      %p266 = scmp.eq.s32.totalorder %s29, 1
      %p267 = por %p265, %p266
      %p269 = scmp.ne.s32.totalorder %s254, %s268
      %p270 = scmp.eq.s32.totalorder %s29, 0
      %p271 = por %p269, %p270
      %s272 = ssub.s32 %s23, %s30
      %p273 = scmp.eq.s32.totalorder %s272, 0
      %s275 = sadd.s32 %s274, 1
      %s276 = scalar_select %p273, %s274, %s275
      %p279 = pneg %p273
      %p280 = scmp.eq.s32.totalorder %s23, 1
      %p281 = por %p279, %p280
      %p282 = scmp.ne.s32.totalorder %s274, %s277
      %p283 = scmp.eq.s32.totalorder %s23, 0
      %p284 = por %p282, %p283
      %p285 = scmp.ne.s32.totalorder %s274, %s277
      %p286 = scmp.eq.s32.totalorder %s28, 1
      %p287 = por %p285, %p286
      %p288 = scmp.ne.s32.totalorder %s277, %s278
      %p289 = scmp.eq.s32.totalorder %s28, 0
      %p290 = por %p288, %p289
      %p291 = scmp.ne.s32.totalorder %s277, %s278
      %p292 = scmp.eq.s32.totalorder %s29, 1
      %p293 = por %p291, %p292
      %p295 = scmp.ne.s32.totalorder %s278, %s294
      %p296 = scmp.eq.s32.totalorder %s29, 0
      %p297 = por %p295, %p296
      %p298 = scmp.le.s32.totalorder 1, %s23
      %p299 = scmp.lt.s32.totalorder %s23, 3
      %p300 = pnand %p298, %p299
      %p301 = pneg %p300
      // Predicated region
      $region9: #{tpu_custom_call.1} parent=5 // pred_check
        _
      $region10: #{tpu_custom_call.1} parent=5 // pred_check_branch
        %303 = sbr.rel (%p300) target = $region12
      $region11: #{tpu_custom_call.1} parent=5 // pred_region
        %s304 = ssub.s32 %s23, 1
        // Predicated region
        $region13: #{tpu_custom_call.1} parent=11 // pred_check
          %p305 = pneg %p96
        $region14: #{tpu_custom_call.1} parent=11 // pred_check_branch
          %307 = sbr.rel (%p305) target = $region16
        $region15: #{tpu_custom_call.1} parent=11 // pred_region
          _
        $region16: #{tpu_custom_call.1} parent=11 // pred_fallthru
          _
        // Predicated region
        $region17: #{tpu_custom_call.1} parent=11 // pred_check
          %p308 = pneg %p117
        $region18: #{tpu_custom_call.1} parent=11 // pred_check_branch
          %310 = sbr.rel (%p308) target = $region20
        $region19: #{tpu_custom_call.1} parent=11 // pred_region
          _
        $region20: #{tpu_custom_call.1} parent=11 // pred_fallthru
          _
        // Predicated region
        $region21: #{tpu_custom_call.1} parent=11 // pred_check
          %p311 = pneg %p138
        $region22: #{tpu_custom_call.1} parent=11 // pred_check_branch
          %313 = sbr.rel (%p311) target = $region24
        $region23: #{tpu_custom_call.1} parent=11 // pred_region
          _
        $region24: #{tpu_custom_call.1} parent=11 // pred_fallthru
          _
        // Predicated region
        $region25: #{tpu_custom_call.1} parent=11 // pred_check
          %p314 = pneg %p159
        $region26: #{tpu_custom_call.1} parent=11 // pred_check_branch
          %316 = sbr.rel (%p314) target = $region28
        $region27: #{tpu_custom_call.1} parent=11 // pred_region
          _
        $region28: #{tpu_custom_call.1} parent=11 // pred_fallthru
          _
        // Predicated region
        $region29: #{tpu_custom_call.1} parent=11 // pred_check
          %p317 = pneg %p180
        $region30: #{tpu_custom_call.1} parent=11 // pred_check_branch
          %319 = sbr.rel (%p317) target = $region32
        $region31: #{tpu_custom_call.1} parent=11 // pred_region
          _
        $region32: #{tpu_custom_call.1} parent=11 // pred_fallthru
          _
        // Predicated region
        $region33: #{tpu_custom_call.1} parent=11 // pred_check
          %p320 = pneg %p201
        $region34: #{tpu_custom_call.1} parent=11 // pred_check_branch
          %322 = sbr.rel (%p320) target = $region36
        $region35: #{tpu_custom_call.1} parent=11 // pred_region
          _
        $region36: #{tpu_custom_call.1} parent=11 // pred_fallthru
          _
        // Predicated region
        $region37: #{tpu_custom_call.1} parent=11 // pred_check
          %p323 = pneg %p222
        $region38: #{tpu_custom_call.1} parent=11 // pred_check_branch
          %325 = sbr.rel (%p323) target = $region40
        $region39: #{tpu_custom_call.1} parent=11 // pred_region
          _
        $region40: #{tpu_custom_call.1} parent=11 // pred_fallthru
          _
        // Predicated region
        $region41: #{tpu_custom_call.1} parent=11 // pred_check
          %p326 = pneg %p243
        $region42: #{tpu_custom_call.1} parent=11 // pred_check_branch
          %328 = sbr.rel (%p326) target = $region44
        $region43: #{tpu_custom_call.1} parent=11 // pred_region
          _
        $region44: #{tpu_custom_call.1} parent=11 // pred_fallthru
          _
        // Predicated region
        $region45: #{tpu_custom_call.1} parent=11 // pred_check
          %p329 = pneg %p264
        $region46: #{tpu_custom_call.1} parent=11 // pred_check_branch
          %331 = sbr.rel (%p329) target = $region48
        $region47: #{tpu_custom_call.1} parent=11 // pred_region
          _
        $region48: #{tpu_custom_call.1} parent=11 // pred_fallthru
          _
      $region12: #{tpu_custom_call.1} parent=5 // pred_fallthru
        _
      %p332 = scmp.lt.s32.totalorder %s23, 2
      // Predicated region
      $region49: #{tpu_custom_call.1} parent=5 // pred_check
        %p333 = pneg %p332
      $region50: #{tpu_custom_call.1} parent=5 // pred_check_branch
        %335 = sbr.rel (%p333) target = $region52
      $region51: #{tpu_custom_call.1} parent=5 // pred_region
        // Predicated region
        $region53: #{tpu_custom_call.1} parent=51 // pred_check
          %p336 = pneg %p43
        $region54: #{tpu_custom_call.1} parent=51 // pred_check_branch
          %338 = sbr.rel (%p336) target = $region56
        $region55: #{tpu_custom_call.1} parent=51 // pred_region
          %p339 = scmp.lt.s32.totalorder %s23, 1
          %s340 = scalar_select %p339, %s23, 1
          %s341 = smul.addr %s340, 8
          %s342 = scalar_lea.vmem %s0, %s341
        $region56: #{tpu_custom_call.1} parent=51 // pred_fallthru
          _
        // Predicated region
        $region57: #{tpu_custom_call.1} parent=51 // pred_check
          %p343 = pneg %p69
        $region58: #{tpu_custom_call.1} parent=51 // pred_check_branch
          %345 = sbr.rel (%p343) target = $region60
        $region59: #{tpu_custom_call.1} parent=51 // pred_region
          %s346 = sand.u32 %s59, 1
          %s347 = scalar_lea.sflag [#allocation3], %s346
          %s348 = sand.u32 %s59, 1
          %s349 = scalar_lea.vmem [#allocation2], %s348
          %s351 = ssub.s32 16, 16
          %352 = vsyncadd %s347, %s351
          %s353 = smul.addr %s23, 16
          %s354 = scalar_lea.hbm %s1, %s353
          %s356 = sshll.u32 %s349, 4
          %s357 = int_to_ptr.vmem [resolvable:$true] %s356
          %359 = dma.hbm_to_vmem [thread:$0]  %s354, 16, %s357, %s347
        $region60: #{tpu_custom_call.1} parent=51 // pred_fallthru
          _
      $region52: #{tpu_custom_call.1} parent=5 // pred_fallthru
        _
      %p360 = scmp.le.s32.totalorder 1, %s23
      %p361 = scmp.lt.s32.totalorder %s23, 3
      %p362 = pnand %p360, %p361
      %p363 = pneg %p362
      // Predicated region
      $region61: #{tpu_custom_call.1} parent=5 // pred_check
        _
      $region62: #{tpu_custom_call.1} parent=5 // pred_check_branch
        %365 = sbr.rel (%p362) target = $region64
      $region63: #{tpu_custom_call.1} parent=5 // pred_region
        %s366 = ssub.s32 %s23, 1
        %s367 = sand.u32 %s62, 1
        %s368 = scalar_lea.sflag [#allocation3], %s367
        %s369 = sand.u32 %s62, 1
        %s370 = scalar_lea.vmem [#allocation2], %s369
        // Predicated region
        $region65: #{tpu_custom_call.1} parent=63 // pred_check
          %p371 = pneg %p75
        $region66: #{tpu_custom_call.1} parent=63 // pred_check_branch
          %373 = sbr.rel (%p371) target = $region68
        $region67: #{tpu_custom_call.1} parent=63 // pred_region
          %374 = dma.done %s368, 16
        $region68: #{tpu_custom_call.1} parent=63 // pred_fallthru
          _
        %p375 = scmp.lt.s32.totalorder %s28, 1
        %s376 = scalar_select %p375, %s28, 1
        %s377 = smul.addr %s376, 8
        %s378 = scalar_lea.vmem %s0, %s377
        %p379 = pneg %p49
        %p380 = pneg %p46
        %s381 = sand.u32 %s62, 1
        %s382 = scalar_lea.sflag [#allocation3], %s381
        %s383 = sand.u32 %s62, 1
        %s384 = scalar_lea.vmem [#allocation2], %s383
        %p385 = pneg %p75
        %p386 = pneg %p72
        %p387 = pneg %p96
        %p388 = pneg %p93
        %p389 = pneg %p117
        %p390 = pneg %p114
        %p391 = pneg %p138
        %p392 = pneg %p135
        %p393 = pneg %p159
        %p394 = pneg %p156
        %p395 = pneg %p180
        %p396 = pneg %p177
        %p397 = pneg %p201
        %p398 = pneg %p198
        %p399 = pneg %p222
        %p400 = pneg %p219
        %p401 = pneg %p243
        %p402 = pneg %p240
        %p403 = pneg %p264
        %p404 = pneg %p261
        %p405 = pneg %p290
        %p406 = pneg %p287
        %s407 = sand.u32 %s277, 1
        %s408 = scalar_lea.sflag [#allocation4], %s407
        %s409 = sand.u32 %s277, 1
        %s410 = scalar_lea.vmem [#allocation5], %s409
        %p411 = scmp.lt.s32.totalorder %s28, 1
        %s412 = scalar_select %p411, %s28, 1
        %s413 = smul.addr %s412, 8
        %s414 = scalar_lea.vmem %s0, %s413
        %v416 = vld [vmem:[%s414] sm:$0xff]
        %v417 = vld [vmem:[%s5] sm:$0xff]
        %v418 = vpack.c.bf16 %v416, %v416
        %v419 = vld [vmem:[%s2] sm:$0xf]
        %v420 = vld [vmem:[%s2 + $0x4] sm:$0xf]
        %v421 = vld [vmem:[%s2 + $0x8] sm:$0xf]
        %v422 = vld [vmem:[%s2 + $0xc] sm:$0xf]
        %v423 = vld [vmem:[%s3] sm:$0x1]
        %v425 = vlaneseq
        %v426 = vshrl.u32 %v425, 7
        %v427 = vsub.s32 0, %v426
        %v428 = vrot.slane %v423, %v427
        %v434 = vunpack.c.l.b16 %v419
        %v435 = vunpack.c.l.b16 %v420
        %v436 = vunpack.c.l.b16 %v421
        %v437 = vunpack.c.l.b16 %v422
        %v438 = vpack.c.b16 %v435, %v434
        %v439 = vpack.c.b16 %v437, %v436
        %vm442 = vcmask 261120
        %v444 = vsel %vm442, %v418, 0
        %446 = vmatprep.subr.bf16.mxu0 0
        %447 = vmatpush1.bf16.msra.mxu0 0
        %448 = vmatprep.subr.bf16.mxu0 0
        %449 = vmatpush1.bf16.msra.mxu0 0
        %450 = vmatprep.subr.bf16.mxu0 0
        %451 = vmatpush1.bf16.msra.mxu0 0
        %452 = vmatprep.subr.bf16.mxu0 0
        %453 = vmatpush1.bf16.msra.mxu0 0
        %454 = vmatprep.subr.bf16.mxu0 0
        %455 = vmatpush1.bf16.msra.mxu0 0
        %456 = vmatprep.subr.bf16.mxu0 0
        %457 = vmatpush1.bf16.msra.mxu0 0
        %458 = vmatprep.subr.bf16.mxu0 0
        %459 = vmatpush1.bf16.msra.mxu0 %v439
        %460 = vmatprep.subr.bf16.mxu0 0
        %461 = vmatpush1.bf16.msra.mxu0 %v438
        %462 = vmatprep.subr.bf16.mxu0 0
        %463 = vmatpush2.bf16.msra.mxu0 0
        %464 = vmatprep.subr.bf16.mxu0 0
        %465 = vmatpush2.bf16.msra.mxu0 0
        %466 = vmatprep.subr.bf16.mxu0 0
        %467 = vmatpush2.bf16.msra.mxu0 0
        %468 = vmatprep.subr.bf16.mxu0 0
        %469 = vmatpush2.bf16.msra.mxu0 0
        %470 = vmatprep.subr.bf16.mxu0 0
        %471 = vmatpush2.bf16.msra.mxu0 0
        %472 = vmatprep.subr.bf16.mxu0 0
        %473 = vmatpush2.bf16.msra.mxu0 0
        %474 = vmatprep.subr.bf16.mxu0 0
        %475 = vmatpush2.bf16.msra.mxu0 0
        %476 = vmatprep.subr.bf16.mxu0 0
        %477 = vmatpush2.bf16.msra.mxu0 0
        %478 = vmatprep.mubr.bf16.mxu0 0
        %479 = vmatmul.mubr.bf16.gmra.mxu0 %v444
        %v480 = vpop.f32.mrf.mxu0
        %v481 = vadd.f32 %v428, %v480
        %v482 = vpop.f32.mrf.mxu0
        %v483 = vpop.f32.mrf.mxu0
        %v484 = vpop.f32.mrf.mxu0
        %485 = vdwg.mxu0
        %v486 = vld [vmem:[%s370] sm:$0x1]
        %vm487 = vcmp.eq.f32.partialorder %v486, 0.0
        %v488 = vsel %vm487, -1e+30, 0.0
        %490 = vrot.lane.b32.xlu0 %v481, 96
        %v491 = vpop.permute.xlu0 %490
        %vm492 = vcmask 31744
        %v493 = vsel %vm492, %v481, 0
        %v495 = vsel %vm492, %v491, 0
        %497 = vmatprep.subr.mxu0 0.0
        %498 = vmatpush1.xpose.msra.mxu0 0.0
        %499 = vmatprep.subr.mxu0 0.0
        %500 = vmatpush1.xpose.msra.mxu0 0.0
        %501 = vmatprep.subr.mxu0 0.0
        %502 = vmatpush1.xpose.msra.mxu0 0.0
        %503 = vmatprep.subr.mxu0 0.0
        %504 = vmatpush1.xpose.msra.mxu0 0.0
        %505 = vmatprep.subr.mxu0 0.0
        %506 = vmatpush1.xpose.msra.mxu0 0.0
        %507 = vmatprep.subr.mxu0 0.0
        %508 = vmatpush1.xpose.msra.mxu0 0.0
        %509 = vmatprep.subr.mxu0 0.0
        %510 = vmatpush1.xpose.msra.mxu0 0.0
        %511 = vmatprep.subr.mxu0 0.0
        %512 = vmatpush1.xpose.msra.mxu0 0.0
        %513 = vmatprep.subr.mxu0 0.0
        %514 = vmatpush1.xpose.msra.mxu0 0.0
        %515 = vmatprep.subr.mxu0 0.0
        %516 = vmatpush1.xpose.msra.mxu0 0.0
        %517 = vmatprep.subr.mxu0 0.0
        %518 = vmatpush1.xpose.msra.mxu0 0.0
        %519 = vmatprep.subr.mxu0 0.0
        %520 = vmatpush1.xpose.msra.mxu0 0.0
        %521 = vmatprep.subr.mxu0 0.0
        %522 = vmatpush1.xpose.msra.mxu0 0.0
        %523 = vmatprep.subr.mxu0 0.0
        %524 = vmatpush1.xpose.msra.mxu0 0.0
        %525 = vmatprep.subr.mxu0 0.0
        %526 = vmatpush1.xpose.msra.mxu0 0.0
        %527 = vmatprep.subr.mxu0 0.0
        %528 = vmatpush1.xpose.msra.mxu0 %v495
        %529 = vmatprep.subr.mxu0 0.0
        %530 = vmatpush2.xpose.msra.mxu0 0.0
        %531 = vmatprep.subr.mxu0 0.0
        %532 = vmatpush2.xpose.msra.mxu0 0.0
        %533 = vmatprep.subr.mxu0 0.0
        %534 = vmatpush2.xpose.msra.mxu0 0.0
        %535 = vmatprep.subr.mxu0 0.0
        %536 = vmatpush2.xpose.msra.mxu0 0.0
        %537 = vmatprep.subr.mxu0 0.0
        %538 = vmatpush2.xpose.msra.mxu0 0.0
        %539 = vmatprep.subr.mxu0 0.0
        %540 = vmatpush2.xpose.msra.mxu0 0.0
        %541 = vmatprep.subr.mxu0 0.0
        %542 = vmatpush2.xpose.msra.mxu0 0.0
        %543 = vmatprep.subr.mxu0 0.0
        %544 = vmatpush2.xpose.msra.mxu0 0.0
        %545 = vmatprep.subr.mxu0 0.0
        %546 = vmatpush2.xpose.msra.mxu0 0.0
        %547 = vmatprep.subr.mxu0 0.0
        %548 = vmatpush2.xpose.msra.mxu0 0.0
        %549 = vmatprep.subr.mxu0 0.0
        %550 = vmatpush2.xpose.msra.mxu0 0.0
        %551 = vmatprep.subr.mxu0 0.0
        %552 = vmatpush2.xpose.msra.mxu0 0.0
        %553 = vmatprep.subr.mxu0 0.0
        %554 = vmatpush2.xpose.msra.mxu0 0.0
        %555 = vmatprep.subr.mxu0 0.0
        %556 = vmatpush2.xpose.msra.mxu0 0.0
        %557 = vmatprep.subr.mxu0 0.0
        %558 = vmatpush2.xpose.msra.mxu0 0.0
        %559 = vmatprep.subr.mxu0 0.0
        %560 = vmatpush2.xpose.msra.mxu0 0.0
        %561 = vmatprep.mubr.f32.mxu0 0.0
        %562 = vmatmul.mubr.f32.gmra.mxu0 %v493
        %v563 = vpop.f32.mrf.mxu0
        %v564 = vadd.f32 0.0, %v563
        %v565 = vpop.f32.mrf.mxu0
        %566 = vdwg.mxu0
        %v567 = vmul.f32 %v564, 0.5
        %v569 = vlaneseq
        %v570 = vshrl.u32 %v569, 7
        %v571 = vsub.s32 0, %v570
        %v572 = vrot.slane %v488, %v571
        %v574 = vadd.f32 %v567, %v572
        %vm575 = vcmask 64512
        %v576 = vsel %vm575, %v574, -inf
        %577 = vmax.xlane.f32.xlu0 %v576
        %v578 = vpop.xlane.xlu0 %577
        %v579 = vsub.f32 %v574, %v578
        %v580 = vmul.f32 %v579, 1.442695
        %v581 = vpow.pop %v580
        %v582 = vsel %vm575, %v581, 0.0
        %583 = vadd.xlane.f32.xlu0 %v582
        %v584 = vpop.xlane.xlu0 %583
        %v585 = vrcp.pop %v584
        %v586 = vmul.f32 %v581, %v585
        %587 = vrot.lane.b32.xlu0 %v481, 64
        %v588 = vpop.permute.xlu0 %587
        %v591 = vsel %vm575, %v586, 0
        %593 = vmatprep.subr.mxu0 0.0
        %594 = vmatpush1.msra.mxu0 0.0
        %595 = vmatprep.subr.mxu0 0.0
        %596 = vmatpush1.msra.mxu0 0.0
        %597 = vmatprep.subr.mxu0 0.0
        %598 = vmatpush1.msra.mxu0 0.0
        %599 = vmatprep.subr.mxu0 0.0
        %600 = vmatpush1.msra.mxu0 0.0
        %601 = vmatprep.subr.mxu0 0.0
        %602 = vmatpush1.msra.mxu0 0.0
        %603 = vmatprep.subr.mxu0 0.0
        %604 = vmatpush1.msra.mxu0 0.0
        %605 = vmatprep.subr.mxu0 0.0
        %606 = vmatpush1.msra.mxu0 0.0
        %607 = vmatprep.subr.mxu0 0.0
        %608 = vmatpush1.msra.mxu0 0.0
        %609 = vmatprep.subr.mxu0 0.0
        %610 = vmatpush1.msra.mxu0 0.0
        %611 = vmatprep.subr.mxu0 0.0
        %612 = vmatpush1.msra.mxu0 0.0
        %613 = vmatprep.subr.mxu0 0.0
        %614 = vmatpush1.msra.mxu0 0.0
        %615 = vmatprep.subr.mxu0 0.0
        %616 = vmatpush1.msra.mxu0 0.0
        %617 = vmatprep.subr.mxu0 0.0
        %618 = vmatpush1.msra.mxu0 0.0
        %619 = vmatprep.subr.mxu0 0.0
        %620 = vmatpush1.msra.mxu0 0.0
        %621 = vmatprep.subr.mxu0 0.0
        %622 = vmatpush1.msra.mxu0 0.0
        %623 = vmatprep.subr.mxu0 0.0
        %624 = vmatpush1.msra.mxu0 %v588
        %625 = vmatprep.subr.mxu0 0.0
        %626 = vmatpush2.msra.mxu0 0.0
        %627 = vmatprep.subr.mxu0 0.0
        %628 = vmatpush2.msra.mxu0 0.0
        %629 = vmatprep.subr.mxu0 0.0
        %630 = vmatpush2.msra.mxu0 0.0
        %631 = vmatprep.subr.mxu0 0.0
        %632 = vmatpush2.msra.mxu0 0.0
        %633 = vmatprep.subr.mxu0 0.0
        %634 = vmatpush2.msra.mxu0 0.0
        %635 = vmatprep.subr.mxu0 0.0
        %636 = vmatpush2.msra.mxu0 0.0
        %637 = vmatprep.subr.mxu0 0.0
        %638 = vmatpush2.msra.mxu0 0.0
        %639 = vmatprep.subr.mxu0 0.0
        %640 = vmatpush2.msra.mxu0 0.0
        %641 = vmatprep.subr.mxu0 0.0
        %642 = vmatpush2.msra.mxu0 0.0
        %643 = vmatprep.subr.mxu0 0.0
        %644 = vmatpush2.msra.mxu0 0.0
        %645 = vmatprep.subr.mxu0 0.0
        %646 = vmatpush2.msra.mxu0 0.0
        %647 = vmatprep.subr.mxu0 0.0
        %648 = vmatpush2.msra.mxu0 0.0
        %649 = vmatprep.subr.mxu0 0.0
        %650 = vmatpush2.msra.mxu0 0.0
        %651 = vmatprep.subr.mxu0 0.0
        %652 = vmatpush2.msra.mxu0 0.0
        %653 = vmatprep.subr.mxu0 0.0
        %654 = vmatpush2.msra.mxu0 0.0
        %655 = vmatprep.subr.mxu0 0.0
        %656 = vmatpush2.msra.mxu0 0.0
        %657 = vmatprep.mubr.f32.mxu0 0.0
        %658 = vmatmul.mubr.f32.gmra.mxu0 %v591
        %v659 = vpop.f32.mrf.mxu0
        %v660 = vadd.f32 0.0, %v659
        %v661 = vpop.f32.mrf.mxu0
        %662 = vdwg.mxu0
        %663 = vrot.lane.b32.xlu0 %v481, 124
        %v664 = vpop.permute.xlu0 %663
        %665 = vrot.lane.b32.xlu0 %v481, 92
        %v666 = vpop.permute.xlu0 %665
        %v667 = vsel %vm492, %v664, 0
        %v669 = vsel %vm492, %v666, 0
        %671 = vmatprep.subr.mxu0 0.0
        %672 = vmatpush1.xpose.msra.mxu0 0.0
        %673 = vmatprep.subr.mxu0 0.0
        %674 = vmatpush1.xpose.msra.mxu0 0.0
        %675 = vmatprep.subr.mxu0 0.0
        %676 = vmatpush1.xpose.msra.mxu0 0.0
        %677 = vmatprep.subr.mxu0 0.0
        %678 = vmatpush1.xpose.msra.mxu0 0.0
        %679 = vmatprep.subr.mxu0 0.0
        %680 = vmatpush1.xpose.msra.mxu0 0.0
        %681 = vmatprep.subr.mxu0 0.0
        %682 = vmatpush1.xpose.msra.mxu0 0.0
        %683 = vmatprep.subr.mxu0 0.0
        %684 = vmatpush1.xpose.msra.mxu0 0.0
        %685 = vmatprep.subr.mxu0 0.0
        %686 = vmatpush1.xpose.msra.mxu0 0.0
        %687 = vmatprep.subr.mxu0 0.0
        %688 = vmatpush1.xpose.msra.mxu0 0.0
        %689 = vmatprep.subr.mxu0 0.0
        %690 = vmatpush1.xpose.msra.mxu0 0.0
        %691 = vmatprep.subr.mxu0 0.0
        %692 = vmatpush1.xpose.msra.mxu0 0.0
        %693 = vmatprep.subr.mxu0 0.0
        %694 = vmatpush1.xpose.msra.mxu0 0.0
        %695 = vmatprep.subr.mxu0 0.0
        %696 = vmatpush1.xpose.msra.mxu0 0.0
        %697 = vmatprep.subr.mxu0 0.0
        %698 = vmatpush1.xpose.msra.mxu0 0.0
        %699 = vmatprep.subr.mxu0 0.0
        %700 = vmatpush1.xpose.msra.mxu0 0.0
        %701 = vmatprep.subr.mxu0 0.0
        %702 = vmatpush1.xpose.msra.mxu0 %v669
        %703 = vmatprep.subr.mxu0 0.0
        %704 = vmatpush2.xpose.msra.mxu0 0.0
        %705 = vmatprep.subr.mxu0 0.0
        %706 = vmatpush2.xpose.msra.mxu0 0.0
        %707 = vmatprep.subr.mxu0 0.0
        %708 = vmatpush2.xpose.msra.mxu0 0.0
        %709 = vmatprep.subr.mxu0 0.0
        %710 = vmatpush2.xpose.msra.mxu0 0.0
        %711 = vmatprep.subr.mxu0 0.0
        %712 = vmatpush2.xpose.msra.mxu0 0.0
        %713 = vmatprep.subr.mxu0 0.0
        %714 = vmatpush2.xpose.msra.mxu0 0.0
        %715 = vmatprep.subr.mxu0 0.0
        %716 = vmatpush2.xpose.msra.mxu0 0.0
        %717 = vmatprep.subr.mxu0 0.0
        %718 = vmatpush2.xpose.msra.mxu0 0.0
        %719 = vmatprep.subr.mxu0 0.0
        %720 = vmatpush2.xpose.msra.mxu0 0.0
        %721 = vmatprep.subr.mxu0 0.0
        %722 = vmatpush2.xpose.msra.mxu0 0.0
        %723 = vmatprep.subr.mxu0 0.0
        %724 = vmatpush2.xpose.msra.mxu0 0.0
        %725 = vmatprep.subr.mxu0 0.0
        %726 = vmatpush2.xpose.msra.mxu0 0.0
        %727 = vmatprep.subr.mxu0 0.0
        %728 = vmatpush2.xpose.msra.mxu0 0.0
        %729 = vmatprep.subr.mxu0 0.0
        %730 = vmatpush2.xpose.msra.mxu0 0.0
        %731 = vmatprep.subr.mxu0 0.0
        %732 = vmatpush2.xpose.msra.mxu0 0.0
        %733 = vmatprep.subr.mxu0 0.0
        %734 = vmatpush2.xpose.msra.mxu0 0.0
        %735 = vmatprep.mubr.f32.mxu0 0.0
        %736 = vmatmul.mubr.f32.gmra.mxu0 %v667
        %v737 = vpop.f32.mrf.mxu0
        %v738 = vadd.f32 0.0, %v737
        %v739 = vpop.f32.mrf.mxu0
        %740 = vdwg.mxu0
        %v741 = vmul.f32 %v738, 0.5
        %v742 = vadd.f32 %v741, %v572
        %v743 = vsel %vm575, %v742, -inf
        %744 = vmax.xlane.f32.xlu0 %v743
        %v745 = vpop.xlane.xlu0 %744
        %v746 = vsub.f32 %v742, %v745
        %v747 = vmul.f32 %v746, 1.442695
        %v748 = vpow.pop %v747
        %v749 = vsel %vm575, %v748, 0.0
        %750 = vadd.xlane.f32.xlu0 %v749
        %v751 = vpop.xlane.xlu0 %750
        %v752 = vrcp.pop %v751
        %v753 = vmul.f32 %v748, %v752
        %754 = vrot.lane.b32.xlu0 %v481, 60
        %v755 = vpop.permute.xlu0 %754
        %v758 = vsel %vm575, %v753, 0
        %760 = vmatprep.subr.mxu0 0.0
        %761 = vmatpush1.msra.mxu0 0.0
        %762 = vmatprep.subr.mxu0 0.0
        %763 = vmatpush1.msra.mxu0 0.0
        %764 = vmatprep.subr.mxu0 0.0
        %765 = vmatpush1.msra.mxu0 0.0
        %766 = vmatprep.subr.mxu0 0.0
        %767 = vmatpush1.msra.mxu0 0.0
        %768 = vmatprep.subr.mxu0 0.0
        %769 = vmatpush1.msra.mxu0 0.0
        %770 = vmatprep.subr.mxu0 0.0
        %771 = vmatpush1.msra.mxu0 0.0
        %772 = vmatprep.subr.mxu0 0.0
        %773 = vmatpush1.msra.mxu0 0.0
        %774 = vmatprep.subr.mxu0 0.0
        %775 = vmatpush1.msra.mxu0 0.0
        %776 = vmatprep.subr.mxu0 0.0
        %777 = vmatpush1.msra.mxu0 0.0
        %778 = vmatprep.subr.mxu0 0.0
        %779 = vmatpush1.msra.mxu0 0.0
        %780 = vmatprep.subr.mxu0 0.0
        %781 = vmatpush1.msra.mxu0 0.0
        %782 = vmatprep.subr.mxu0 0.0
        %783 = vmatpush1.msra.mxu0 0.0
        %784 = vmatprep.subr.mxu0 0.0
        %785 = vmatpush1.msra.mxu0 0.0
        %786 = vmatprep.subr.mxu0 0.0
        %787 = vmatpush1.msra.mxu0 0.0
        %788 = vmatprep.subr.mxu0 0.0
        %789 = vmatpush1.msra.mxu0 0.0
        %790 = vmatprep.subr.mxu0 0.0
        %791 = vmatpush1.msra.mxu0 %v755
        %792 = vmatprep.subr.mxu0 0.0
        %793 = vmatpush2.msra.mxu0 0.0
        %794 = vmatprep.subr.mxu0 0.0
        %795 = vmatpush2.msra.mxu0 0.0
        %796 = vmatprep.subr.mxu0 0.0
        %797 = vmatpush2.msra.mxu0 0.0
        %798 = vmatprep.subr.mxu0 0.0
        %799 = vmatpush2.msra.mxu0 0.0
        %800 = vmatprep.subr.mxu0 0.0
        %801 = vmatpush2.msra.mxu0 0.0
        %802 = vmatprep.subr.mxu0 0.0
        %803 = vmatpush2.msra.mxu0 0.0
        %804 = vmatprep.subr.mxu0 0.0
        %805 = vmatpush2.msra.mxu0 0.0
        %806 = vmatprep.subr.mxu0 0.0
        %807 = vmatpush2.msra.mxu0 0.0
        %808 = vmatprep.subr.mxu0 0.0
        %809 = vmatpush2.msra.mxu0 0.0
        %810 = vmatprep.subr.mxu0 0.0
        %811 = vmatpush2.msra.mxu0 0.0
        %812 = vmatprep.subr.mxu0 0.0
        %813 = vmatpush2.msra.mxu0 0.0
        %814 = vmatprep.subr.mxu0 0.0
        %815 = vmatpush2.msra.mxu0 0.0
        %816 = vmatprep.subr.mxu0 0.0
        %817 = vmatpush2.msra.mxu0 0.0
        %818 = vmatprep.subr.mxu0 0.0
        %819 = vmatpush2.msra.mxu0 0.0
        %820 = vmatprep.subr.mxu0 0.0
        %821 = vmatpush2.msra.mxu0 0.0
        %822 = vmatprep.subr.mxu0 0.0
        %823 = vmatpush2.msra.mxu0 0.0
        %824 = vmatprep.mubr.f32.mxu0 0.0
        %825 = vmatmul.mubr.f32.gmra.mxu0 %v758
        %v826 = vpop.f32.mrf.mxu0
        %v827 = vadd.f32 0.0, %v826
        %v828 = vpop.f32.mrf.mxu0
        %829 = vdwg.mxu0
        %830 = vrot.lane.b32.xlu0 %v481, 120
        %v831 = vpop.permute.xlu0 %830
        %832 = vrot.lane.b32.xlu0 %v481, 88
        %v833 = vpop.permute.xlu0 %832
        %v834 = vsel %vm492, %v831, 0
        %v836 = vsel %vm492, %v833, 0
        %838 = vmatprep.subr.mxu0 0.0
        %839 = vmatpush1.xpose.msra.mxu0 0.0
        %840 = vmatprep.subr.mxu0 0.0
        %841 = vmatpush1.xpose.msra.mxu0 0.0
        %842 = vmatprep.subr.mxu0 0.0
        %843 = vmatpush1.xpose.msra.mxu0 0.0
        %844 = vmatprep.subr.mxu0 0.0
        %845 = vmatpush1.xpose.msra.mxu0 0.0
        %846 = vmatprep.subr.mxu0 0.0
        %847 = vmatpush1.xpose.msra.mxu0 0.0
        %848 = vmatprep.subr.mxu0 0.0
        %849 = vmatpush1.xpose.msra.mxu0 0.0
        %850 = vmatprep.subr.mxu0 0.0
        %851 = vmatpush1.xpose.msra.mxu0 0.0
        %852 = vmatprep.subr.mxu0 0.0
        %853 = vmatpush1.xpose.msra.mxu0 0.0
        %854 = vmatprep.subr.mxu0 0.0
        %855 = vmatpush1.xpose.msra.mxu0 0.0
        %856 = vmatprep.subr.mxu0 0.0
        %857 = vmatpush1.xpose.msra.mxu0 0.0
        %858 = vmatprep.subr.mxu0 0.0
        %859 = vmatpush1.xpose.msra.mxu0 0.0
        %860 = vmatprep.subr.mxu0 0.0
        %861 = vmatpush1.xpose.msra.mxu0 0.0
        %862 = vmatprep.subr.mxu0 0.0
        %863 = vmatpush1.xpose.msra.mxu0 0.0
        %864 = vmatprep.subr.mxu0 0.0
        %865 = vmatpush1.xpose.msra.mxu0 0.0
        %866 = vmatprep.subr.mxu0 0.0
        %867 = vmatpush1.xpose.msra.mxu0 0.0
        %868 = vmatprep.subr.mxu0 0.0
        %869 = vmatpush1.xpose.msra.mxu0 %v836
        %870 = vmatprep.subr.mxu0 0.0
        %871 = vmatpush2.xpose.msra.mxu0 0.0
        %872 = vmatprep.subr.mxu0 0.0
        %873 = vmatpush2.xpose.msra.mxu0 0.0
        %874 = vmatprep.subr.mxu0 0.0
        %875 = vmatpush2.xpose.msra.mxu0 0.0
        %876 = vmatprep.subr.mxu0 0.0
        %877 = vmatpush2.xpose.msra.mxu0 0.0
        %878 = vmatprep.subr.mxu0 0.0
        %879 = vmatpush2.xpose.msra.mxu0 0.0
        %880 = vmatprep.subr.mxu0 0.0
        %881 = vmatpush2.xpose.msra.mxu0 0.0
        %882 = vmatprep.subr.mxu0 0.0
        %883 = vmatpush2.xpose.msra.mxu0 0.0
        %884 = vmatprep.subr.mxu0 0.0
        %885 = vmatpush2.xpose.msra.mxu0 0.0
        %886 = vmatprep.subr.mxu0 0.0
        %887 = vmatpush2.xpose.msra.mxu0 0.0
        %888 = vmatprep.subr.mxu0 0.0
        %889 = vmatpush2.xpose.msra.mxu0 0.0
        %890 = vmatprep.subr.mxu0 0.0
        %891 = vmatpush2.xpose.msra.mxu0 0.0
        %892 = vmatprep.subr.mxu0 0.0
        %893 = vmatpush2.xpose.msra.mxu0 0.0
        %894 = vmatprep.subr.mxu0 0.0
        %895 = vmatpush2.xpose.msra.mxu0 0.0
        %896 = vmatprep.subr.mxu0 0.0
        %897 = vmatpush2.xpose.msra.mxu0 0.0
        %898 = vmatprep.subr.mxu0 0.0
        %899 = vmatpush2.xpose.msra.mxu0 0.0
        %900 = vmatprep.subr.mxu0 0.0
        %901 = vmatpush2.xpose.msra.mxu0 0.0
        %902 = vmatprep.mubr.f32.mxu0 0.0
        %903 = vmatmul.mubr.f32.gmra.mxu0 %v834
        %v904 = vpop.f32.mrf.mxu0
        %v905 = vadd.f32 0.0, %v904
        %v906 = vpop.f32.mrf.mxu0
        %907 = vdwg.mxu0
        %v908 = vmul.f32 %v905, 0.5
        %v909 = vadd.f32 %v908, %v572
        %v910 = vsel %vm575, %v909, -inf
        %911 = vmax.xlane.f32.xlu0 %v910
        %v912 = vpop.xlane.xlu0 %911
        %v913 = vsub.f32 %v909, %v912
        %v914 = vmul.f32 %v913, 1.442695
        %v915 = vpow.pop %v914
        %v916 = vsel %vm575, %v915, 0.0
        %917 = vadd.xlane.f32.xlu0 %v916
        %v918 = vpop.xlane.xlu0 %917
        %v919 = vrcp.pop %v918
        %v920 = vmul.f32 %v915, %v919
        %921 = vrot.lane.b32.xlu0 %v481, 56
        %v922 = vpop.permute.xlu0 %921
        %v925 = vsel %vm575, %v920, 0
        %927 = vmatprep.subr.mxu0 0.0
        %928 = vmatpush1.msra.mxu0 0.0
        %929 = vmatprep.subr.mxu0 0.0
        %930 = vmatpush1.msra.mxu0 0.0
        %931 = vmatprep.subr.mxu0 0.0
        %932 = vmatpush1.msra.mxu0 0.0
        %933 = vmatprep.subr.mxu0 0.0
        %934 = vmatpush1.msra.mxu0 0.0
        %935 = vmatprep.subr.mxu0 0.0
        %936 = vmatpush1.msra.mxu0 0.0
        %937 = vmatprep.subr.mxu0 0.0
        %938 = vmatpush1.msra.mxu0 0.0
        %939 = vmatprep.subr.mxu0 0.0
        %940 = vmatpush1.msra.mxu0 0.0
        %941 = vmatprep.subr.mxu0 0.0
        %942 = vmatpush1.msra.mxu0 0.0
        %943 = vmatprep.subr.mxu0 0.0
        %944 = vmatpush1.msra.mxu0 0.0
        %945 = vmatprep.subr.mxu0 0.0
        %946 = vmatpush1.msra.mxu0 0.0
        %947 = vmatprep.subr.mxu0 0.0
        %948 = vmatpush1.msra.mxu0 0.0
        %949 = vmatprep.subr.mxu0 0.0
        %950 = vmatpush1.msra.mxu0 0.0
        %951 = vmatprep.subr.mxu0 0.0
        %952 = vmatpush1.msra.mxu0 0.0
        %953 = vmatprep.subr.mxu0 0.0
        %954 = vmatpush1.msra.mxu0 0.0
        %955 = vmatprep.subr.mxu0 0.0
        %956 = vmatpush1.msra.mxu0 0.0
        %957 = vmatprep.subr.mxu0 0.0
        %958 = vmatpush1.msra.mxu0 %v922
        %959 = vmatprep.subr.mxu0 0.0
        %960 = vmatpush2.msra.mxu0 0.0
        %961 = vmatprep.subr.mxu0 0.0
        %962 = vmatpush2.msra.mxu0 0.0
        %963 = vmatprep.subr.mxu0 0.0
        %964 = vmatpush2.msra.mxu0 0.0
        %965 = vmatprep.subr.mxu0 0.0
        %966 = vmatpush2.msra.mxu0 0.0
        %967 = vmatprep.subr.mxu0 0.0
        %968 = vmatpush2.msra.mxu0 0.0
        %969 = vmatprep.subr.mxu0 0.0
        %970 = vmatpush2.msra.mxu0 0.0
        %971 = vmatprep.subr.mxu0 0.0
        %972 = vmatpush2.msra.mxu0 0.0
        %973 = vmatprep.subr.mxu0 0.0
        %974 = vmatpush2.msra.mxu0 0.0
        %975 = vmatprep.subr.mxu0 0.0
        %976 = vmatpush2.msra.mxu0 0.0
        %977 = vmatprep.subr.mxu0 0.0
        %978 = vmatpush2.msra.mxu0 0.0
        %979 = vmatprep.subr.mxu0 0.0
        %980 = vmatpush2.msra.mxu0 0.0
        %981 = vmatprep.subr.mxu0 0.0
        %982 = vmatpush2.msra.mxu0 0.0
        %983 = vmatprep.subr.mxu0 0.0
        %984 = vmatpush2.msra.mxu0 0.0
        %985 = vmatprep.subr.mxu0 0.0
        %986 = vmatpush2.msra.mxu0 0.0
        %987 = vmatprep.subr.mxu0 0.0
        %988 = vmatpush2.msra.mxu0 0.0
        %989 = vmatprep.subr.mxu0 0.0
        %990 = vmatpush2.msra.mxu0 0.0
        %991 = vmatprep.mubr.f32.mxu0 0.0
        %992 = vmatmul.mubr.f32.gmra.mxu0 %v925
        %v993 = vpop.f32.mrf.mxu0
        %v994 = vadd.f32 0.0, %v993
        %v995 = vpop.f32.mrf.mxu0
        %996 = vdwg.mxu0
        %997 = vrot.lane.b32.xlu0 %v481, 116
        %v998 = vpop.permute.xlu0 %997
        %999 = vrot.lane.b32.xlu0 %v481, 84
        %v1000 = vpop.permute.xlu0 %999
        %v1001 = vsel %vm492, %v998, 0
        %v1003 = vsel %vm492, %v1000, 0
        %1005 = vmatprep.subr.mxu0 0.0
        %1006 = vmatpush1.xpose.msra.mxu0 0.0
        %1007 = vmatprep.subr.mxu0 0.0
        %1008 = vmatpush1.xpose.msra.mxu0 0.0
        %1009 = vmatprep.subr.mxu0 0.0
        %1010 = vmatpush1.xpose.msra.mxu0 0.0
        %1011 = vmatprep.subr.mxu0 0.0
        %1012 = vmatpush1.xpose.msra.mxu0 0.0
        %1013 = vmatprep.subr.mxu0 0.0
        %1014 = vmatpush1.xpose.msra.mxu0 0.0
        %1015 = vmatprep.subr.mxu0 0.0
        %1016 = vmatpush1.xpose.msra.mxu0 0.0
        %1017 = vmatprep.subr.mxu0 0.0
        %1018 = vmatpush1.xpose.msra.mxu0 0.0
        %1019 = vmatprep.subr.mxu0 0.0
        %1020 = vmatpush1.xpose.msra.mxu0 0.0
        %1021 = vmatprep.subr.mxu0 0.0
        %1022 = vmatpush1.xpose.msra.mxu0 0.0
        %1023 = vmatprep.subr.mxu0 0.0
        %1024 = vmatpush1.xpose.msra.mxu0 0.0
        %1025 = vmatprep.subr.mxu0 0.0
        %1026 = vmatpush1.xpose.msra.mxu0 0.0
        %1027 = vmatprep.subr.mxu0 0.0
        %1028 = vmatpush1.xpose.msra.mxu0 0.0
        %1029 = vmatprep.subr.mxu0 0.0
        %1030 = vmatpush1.xpose.msra.mxu0 0.0
        %1031 = vmatprep.subr.mxu0 0.0
        %1032 = vmatpush1.xpose.msra.mxu0 0.0
        %1033 = vmatprep.subr.mxu0 0.0
        %1034 = vmatpush1.xpose.msra.mxu0 0.0
        %1035 = vmatprep.subr.mxu0 0.0
        %1036 = vmatpush1.xpose.msra.mxu0 %v1003
        %1037 = vmatprep.subr.mxu0 0.0
        %1038 = vmatpush2.xpose.msra.mxu0 0.0
        %1039 = vmatprep.subr.mxu0 0.0
        %1040 = vmatpush2.xpose.msra.mxu0 0.0
        %1041 = vmatprep.subr.mxu0 0.0
        %1042 = vmatpush2.xpose.msra.mxu0 0.0
        %1043 = vmatprep.subr.mxu0 0.0
        %1044 = vmatpush2.xpose.msra.mxu0 0.0
        %1045 = vmatprep.subr.mxu0 0.0
        %1046 = vmatpush2.xpose.msra.mxu0 0.0
        %1047 = vmatprep.subr.mxu0 0.0
        %1048 = vmatpush2.xpose.msra.mxu0 0.0
        %1049 = vmatprep.subr.mxu0 0.0
        %1050 = vmatpush2.xpose.msra.mxu0 0.0
        %1051 = vmatprep.subr.mxu0 0.0
        %1052 = vmatpush2.xpose.msra.mxu0 0.0
        %1053 = vmatprep.subr.mxu0 0.0
        %1054 = vmatpush2.xpose.msra.mxu0 0.0
        %1055 = vmatprep.subr.mxu0 0.0
        %1056 = vmatpush2.xpose.msra.mxu0 0.0
        %1057 = vmatprep.subr.mxu0 0.0
        %1058 = vmatpush2.xpose.msra.mxu0 0.0
        %1059 = vmatprep.subr.mxu0 0.0
        %1060 = vmatpush2.xpose.msra.mxu0 0.0
        %1061 = vmatprep.subr.mxu0 0.0
        %1062 = vmatpush2.xpose.msra.mxu0 0.0
        %1063 = vmatprep.subr.mxu0 0.0
        %1064 = vmatpush2.xpose.msra.mxu0 0.0
        %1065 = vmatprep.subr.mxu0 0.0
        %1066 = vmatpush2.xpose.msra.mxu0 0.0
        %1067 = vmatprep.subr.mxu0 0.0
        %1068 = vmatpush2.xpose.msra.mxu0 0.0
        %1069 = vmatprep.mubr.f32.mxu0 0.0
        %1070 = vmatmul.mubr.f32.gmra.mxu0 %v1001
        %v1071 = vpop.f32.mrf.mxu0
        %v1072 = vadd.f32 0.0, %v1071
        %v1073 = vpop.f32.mrf.mxu0
        %1074 = vdwg.mxu0
        %v1075 = vmul.f32 %v1072, 0.5
        %v1076 = vadd.f32 %v1075, %v572
        %v1077 = vsel %vm575, %v1076, -inf
        %1078 = vmax.xlane.f32.xlu0 %v1077
        %v1079 = vpop.xlane.xlu0 %1078
        %v1080 = vsub.f32 %v1076, %v1079
        %v1081 = vmul.f32 %v1080, 1.442695
        %v1082 = vpow.pop %v1081
        %v1083 = vsel %vm575, %v1082, 0.0
        %1084 = vadd.xlane.f32.xlu0 %v1083
        %v1085 = vpop.xlane.xlu0 %1084
        %v1086 = vrcp.pop %v1085
        %v1087 = vmul.f32 %v1082, %v1086
        %1088 = vrot.lane.b32.xlu0 %v481, 52
        %v1089 = vpop.permute.xlu0 %1088
        %v1092 = vsel %vm575, %v1087, 0
        %1094 = vmatprep.subr.mxu0 0.0
        %1095 = vmatpush1.msra.mxu0 0.0
        %1096 = vmatprep.subr.mxu0 0.0
        %1097 = vmatpush1.msra.mxu0 0.0
        %1098 = vmatprep.subr.mxu0 0.0
        %1099 = vmatpush1.msra.mxu0 0.0
        %1100 = vmatprep.subr.mxu0 0.0
        %1101 = vmatpush1.msra.mxu0 0.0
        %1102 = vmatprep.subr.mxu0 0.0
        %1103 = vmatpush1.msra.mxu0 0.0
        %1104 = vmatprep.subr.mxu0 0.0
        %1105 = vmatpush1.msra.mxu0 0.0
        %1106 = vmatprep.subr.mxu0 0.0
        %1107 = vmatpush1.msra.mxu0 0.0
        %1108 = vmatprep.subr.mxu0 0.0
        %1109 = vmatpush1.msra.mxu0 0.0
        %1110 = vmatprep.subr.mxu0 0.0
        %1111 = vmatpush1.msra.mxu0 0.0
        %1112 = vmatprep.subr.mxu0 0.0
        %1113 = vmatpush1.msra.mxu0 0.0
        %1114 = vmatprep.subr.mxu0 0.0
        %1115 = vmatpush1.msra.mxu0 0.0
        %1116 = vmatprep.subr.mxu0 0.0
        %1117 = vmatpush1.msra.mxu0 0.0
        %1118 = vmatprep.subr.mxu0 0.0
        %1119 = vmatpush1.msra.mxu0 0.0
        %1120 = vmatprep.subr.mxu0 0.0
        %1121 = vmatpush1.msra.mxu0 0.0
        %1122 = vmatprep.subr.mxu0 0.0
        %1123 = vmatpush1.msra.mxu0 0.0
        %1124 = vmatprep.subr.mxu0 0.0
        %1125 = vmatpush1.msra.mxu0 %v1089
        %1126 = vmatprep.subr.mxu0 0.0
        %1127 = vmatpush2.msra.mxu0 0.0
        %1128 = vmatprep.subr.mxu0 0.0
        %1129 = vmatpush2.msra.mxu0 0.0
        %1130 = vmatprep.subr.mxu0 0.0
        %1131 = vmatpush2.msra.mxu0 0.0
        %1132 = vmatprep.subr.mxu0 0.0
        %1133 = vmatpush2.msra.mxu0 0.0
        %1134 = vmatprep.subr.mxu0 0.0
        %1135 = vmatpush2.msra.mxu0 0.0
        %1136 = vmatprep.subr.mxu0 0.0
        %1137 = vmatpush2.msra.mxu0 0.0
        %1138 = vmatprep.subr.mxu0 0.0
        %1139 = vmatpush2.msra.mxu0 0.0
        %1140 = vmatprep.subr.mxu0 0.0
        %1141 = vmatpush2.msra.mxu0 0.0
        %1142 = vmatprep.subr.mxu0 0.0
        %1143 = vmatpush2.msra.mxu0 0.0
        %1144 = vmatprep.subr.mxu0 0.0
        %1145 = vmatpush2.msra.mxu0 0.0
        %1146 = vmatprep.subr.mxu0 0.0
        %1147 = vmatpush2.msra.mxu0 0.0
        %1148 = vmatprep.subr.mxu0 0.0
        %1149 = vmatpush2.msra.mxu0 0.0
        %1150 = vmatprep.subr.mxu0 0.0
        %1151 = vmatpush2.msra.mxu0 0.0
        %1152 = vmatprep.subr.mxu0 0.0
        %1153 = vmatpush2.msra.mxu0 0.0
        %1154 = vmatprep.subr.mxu0 0.0
        %1155 = vmatpush2.msra.mxu0 0.0
        %1156 = vmatprep.subr.mxu0 0.0
        %1157 = vmatpush2.msra.mxu0 0.0
        %1158 = vmatprep.mubr.f32.mxu0 0.0
        %1159 = vmatmul.mubr.f32.gmra.mxu0 %v1092
        %v1160 = vpop.f32.mrf.mxu0
        %v1161 = vadd.f32 0.0, %v1160
        %v1162 = vpop.f32.mrf.mxu0
        %1163 = vdwg.mxu0
        %1164 = vrot.lane.b32.xlu0 %v481, 112
        %v1165 = vpop.permute.xlu0 %1164
        %1166 = vrot.lane.b32.xlu0 %v481, 80
        %v1167 = vpop.permute.xlu0 %1166
        %v1168 = vsel %vm492, %v1165, 0
        %v1170 = vsel %vm492, %v1167, 0
        %1172 = vmatprep.subr.mxu0 0.0
        %1173 = vmatpush1.xpose.msra.mxu0 0.0
        %1174 = vmatprep.subr.mxu0 0.0
        %1175 = vmatpush1.xpose.msra.mxu0 0.0
        %1176 = vmatprep.subr.mxu0 0.0
        %1177 = vmatpush1.xpose.msra.mxu0 0.0
        %1178 = vmatprep.subr.mxu0 0.0
        %1179 = vmatpush1.xpose.msra.mxu0 0.0
        %1180 = vmatprep.subr.mxu0 0.0
        %1181 = vmatpush1.xpose.msra.mxu0 0.0
        %1182 = vmatprep.subr.mxu0 0.0
        %1183 = vmatpush1.xpose.msra.mxu0 0.0
        %1184 = vmatprep.subr.mxu0 0.0
        %1185 = vmatpush1.xpose.msra.mxu0 0.0
        %1186 = vmatprep.subr.mxu0 0.0
        %1187 = vmatpush1.xpose.msra.mxu0 0.0
        %1188 = vmatprep.subr.mxu0 0.0
        %1189 = vmatpush1.xpose.msra.mxu0 0.0
        %1190 = vmatprep.subr.mxu0 0.0
        %1191 = vmatpush1.xpose.msra.mxu0 0.0
        %1192 = vmatprep.subr.mxu0 0.0
        %1193 = vmatpush1.xpose.msra.mxu0 0.0
        %1194 = vmatprep.subr.mxu0 0.0
        %1195 = vmatpush1.xpose.msra.mxu0 0.0
        %1196 = vmatprep.subr.mxu0 0.0
        %1197 = vmatpush1.xpose.msra.mxu0 0.0
        %1198 = vmatprep.subr.mxu0 0.0
        %1199 = vmatpush1.xpose.msra.mxu0 0.0
        %1200 = vmatprep.subr.mxu0 0.0
        %1201 = vmatpush1.xpose.msra.mxu0 0.0
        %1202 = vmatprep.subr.mxu0 0.0
        %1203 = vmatpush1.xpose.msra.mxu0 %v1170
        %1204 = vmatprep.subr.mxu0 0.0
        %1205 = vmatpush2.xpose.msra.mxu0 0.0
        %1206 = vmatprep.subr.mxu0 0.0
        %1207 = vmatpush2.xpose.msra.mxu0 0.0
        %1208 = vmatprep.subr.mxu0 0.0
        %1209 = vmatpush2.xpose.msra.mxu0 0.0
        %1210 = vmatprep.subr.mxu0 0.0
        %1211 = vmatpush2.xpose.msra.mxu0 0.0
        %1212 = vmatprep.subr.mxu0 0.0
        %1213 = vmatpush2.xpose.msra.mxu0 0.0
        %1214 = vmatprep.subr.mxu0 0.0
        %1215 = vmatpush2.xpose.msra.mxu0 0.0
        %1216 = vmatprep.subr.mxu0 0.0
        %1217 = vmatpush2.xpose.msra.mxu0 0.0
        %1218 = vmatprep.subr.mxu0 0.0
        %1219 = vmatpush2.xpose.msra.mxu0 0.0
        %1220 = vmatprep.subr.mxu0 0.0
        %1221 = vmatpush2.xpose.msra.mxu0 0.0
        %1222 = vmatprep.subr.mxu0 0.0
        %1223 = vmatpush2.xpose.msra.mxu0 0.0
        %1224 = vmatprep.subr.mxu0 0.0
        %1225 = vmatpush2.xpose.msra.mxu0 0.0
        %1226 = vmatprep.subr.mxu0 0.0
        %1227 = vmatpush2.xpose.msra.mxu0 0.0
        %1228 = vmatprep.subr.mxu0 0.0
        %1229 = vmatpush2.xpose.msra.mxu0 0.0
        %1230 = vmatprep.subr.mxu0 0.0
        %1231 = vmatpush2.xpose.msra.mxu0 0.0
        %1232 = vmatprep.subr.mxu0 0.0
        %1233 = vmatpush2.xpose.msra.mxu0 0.0
        %1234 = vmatprep.subr.mxu0 0.0
        %1235 = vmatpush2.xpose.msra.mxu0 0.0
        %1236 = vmatprep.mubr.f32.mxu0 0.0
        %1237 = vmatmul.mubr.f32.gmra.mxu0 %v1168
        %v1238 = vpop.f32.mrf.mxu0
        %v1239 = vadd.f32 0.0, %v1238
        %v1240 = vpop.f32.mrf.mxu0
        %1241 = vdwg.mxu0
        %v1242 = vmul.f32 %v1239, 0.5
        %v1243 = vadd.f32 %v1242, %v572
        %v1244 = vsel %vm575, %v1243, -inf
        %1245 = vmax.xlane.f32.xlu0 %v1244
        %v1246 = vpop.xlane.xlu0 %1245
        %v1247 = vsub.f32 %v1243, %v1246
        %v1248 = vmul.f32 %v1247, 1.442695
        %v1249 = vpow.pop %v1248
        %v1250 = vsel %vm575, %v1249, 0.0
        %1251 = vadd.xlane.f32.xlu0 %v1250
        %v1252 = vpop.xlane.xlu0 %1251
        %v1253 = vrcp.pop %v1252
        %v1254 = vmul.f32 %v1249, %v1253
        %1255 = vrot.lane.b32.xlu0 %v481, 48
        %v1256 = vpop.permute.xlu0 %1255
        %v1259 = vsel %vm575, %v1254, 0
        %1261 = vmatprep.subr.mxu0 0.0
        %1262 = vmatpush1.msra.mxu0 0.0
        %1263 = vmatprep.subr.mxu0 0.0
        %1264 = vmatpush1.msra.mxu0 0.0
        %1265 = vmatprep.subr.mxu0 0.0
        %1266 = vmatpush1.msra.mxu0 0.0
        %1267 = vmatprep.subr.mxu0 0.0
        %1268 = vmatpush1.msra.mxu0 0.0
        %1269 = vmatprep.subr.mxu0 0.0
        %1270 = vmatpush1.msra.mxu0 0.0
        %1271 = vmatprep.subr.mxu0 0.0
        %1272 = vmatpush1.msra.mxu0 0.0
        %1273 = vmatprep.subr.mxu0 0.0
        %1274 = vmatpush1.msra.mxu0 0.0
        %1275 = vmatprep.subr.mxu0 0.0
        %1276 = vmatpush1.msra.mxu0 0.0
        %1277 = vmatprep.subr.mxu0 0.0
        %1278 = vmatpush1.msra.mxu0 0.0
        %1279 = vmatprep.subr.mxu0 0.0
        %1280 = vmatpush1.msra.mxu0 0.0
        %1281 = vmatprep.subr.mxu0 0.0
        %1282 = vmatpush1.msra.mxu0 0.0
        %1283 = vmatprep.subr.mxu0 0.0
        %1284 = vmatpush1.msra.mxu0 0.0
        %1285 = vmatprep.subr.mxu0 0.0
        %1286 = vmatpush1.msra.mxu0 0.0
        %1287 = vmatprep.subr.mxu0 0.0
        %1288 = vmatpush1.msra.mxu0 0.0
        %1289 = vmatprep.subr.mxu0 0.0
        %1290 = vmatpush1.msra.mxu0 0.0
        %1291 = vmatprep.subr.mxu0 0.0
        %1292 = vmatpush1.msra.mxu0 %v1256
        %1293 = vmatprep.subr.mxu0 0.0
        %1294 = vmatpush2.msra.mxu0 0.0
        %1295 = vmatprep.subr.mxu0 0.0
        %1296 = vmatpush2.msra.mxu0 0.0
        %1297 = vmatprep.subr.mxu0 0.0
        %1298 = vmatpush2.msra.mxu0 0.0
        %1299 = vmatprep.subr.mxu0 0.0
        %1300 = vmatpush2.msra.mxu0 0.0
        %1301 = vmatprep.subr.mxu0 0.0
        %1302 = vmatpush2.msra.mxu0 0.0
        %1303 = vmatprep.subr.mxu0 0.0
        %1304 = vmatpush2.msra.mxu0 0.0
        %1305 = vmatprep.subr.mxu0 0.0
        %1306 = vmatpush2.msra.mxu0 0.0
        %1307 = vmatprep.subr.mxu0 0.0
        %1308 = vmatpush2.msra.mxu0 0.0
        %1309 = vmatprep.subr.mxu0 0.0
        %1310 = vmatpush2.msra.mxu0 0.0
        %1311 = vmatprep.subr.mxu0 0.0
        %1312 = vmatpush2.msra.mxu0 0.0
        %1313 = vmatprep.subr.mxu0 0.0
        %1314 = vmatpush2.msra.mxu0 0.0
        %1315 = vmatprep.subr.mxu0 0.0
        %1316 = vmatpush2.msra.mxu0 0.0
        %1317 = vmatprep.subr.mxu0 0.0
        %1318 = vmatpush2.msra.mxu0 0.0
        %1319 = vmatprep.subr.mxu0 0.0
        %1320 = vmatpush2.msra.mxu0 0.0
        %1321 = vmatprep.subr.mxu0 0.0
        %1322 = vmatpush2.msra.mxu0 0.0
        %1323 = vmatprep.subr.mxu0 0.0
        %1324 = vmatpush2.msra.mxu0 0.0
        %1325 = vmatprep.mubr.f32.mxu0 0.0
        %1326 = vmatmul.mubr.f32.gmra.mxu0 %v1259
        %v1327 = vpop.f32.mrf.mxu0
        %v1328 = vadd.f32 0.0, %v1327
        %v1329 = vpop.f32.mrf.mxu0
        %1330 = vdwg.mxu0
        %1331 = vrot.lane.b32.xlu0 %v481, 108
        %v1332 = vpop.permute.xlu0 %1331
        %1333 = vrot.lane.b32.xlu0 %v481, 76
        %v1334 = vpop.permute.xlu0 %1333
        %v1335 = vsel %vm492, %v1332, 0
        %v1337 = vsel %vm492, %v1334, 0
        %1339 = vmatprep.subr.mxu0 0.0
        %1340 = vmatpush1.xpose.msra.mxu0 0.0
        %1341 = vmatprep.subr.mxu0 0.0
        %1342 = vmatpush1.xpose.msra.mxu0 0.0
        %1343 = vmatprep.subr.mxu0 0.0
        %1344 = vmatpush1.xpose.msra.mxu0 0.0
        %1345 = vmatprep.subr.mxu0 0.0
        %1346 = vmatpush1.xpose.msra.mxu0 0.0
        %1347 = vmatprep.subr.mxu0 0.0
        %1348 = vmatpush1.xpose.msra.mxu0 0.0
        %1349 = vmatprep.subr.mxu0 0.0
        %1350 = vmatpush1.xpose.msra.mxu0 0.0
        %1351 = vmatprep.subr.mxu0 0.0
        %1352 = vmatpush1.xpose.msra.mxu0 0.0
        %1353 = vmatprep.subr.mxu0 0.0
        %1354 = vmatpush1.xpose.msra.mxu0 0.0
        %1355 = vmatprep.subr.mxu0 0.0
        %1356 = vmatpush1.xpose.msra.mxu0 0.0
        %1357 = vmatprep.subr.mxu0 0.0
        %1358 = vmatpush1.xpose.msra.mxu0 0.0
        %1359 = vmatprep.subr.mxu0 0.0
        %1360 = vmatpush1.xpose.msra.mxu0 0.0
        %1361 = vmatprep.subr.mxu0 0.0
        %1362 = vmatpush1.xpose.msra.mxu0 0.0
        %1363 = vmatprep.subr.mxu0 0.0
        %1364 = vmatpush1.xpose.msra.mxu0 0.0
        %1365 = vmatprep.subr.mxu0 0.0
        %1366 = vmatpush1.xpose.msra.mxu0 0.0
        %1367 = vmatprep.subr.mxu0 0.0
        %1368 = vmatpush1.xpose.msra.mxu0 0.0
        %1369 = vmatprep.subr.mxu0 0.0
        %1370 = vmatpush1.xpose.msra.mxu0 %v1337
        %1371 = vmatprep.subr.mxu0 0.0
        %1372 = vmatpush2.xpose.msra.mxu0 0.0
        %1373 = vmatprep.subr.mxu0 0.0
        %1374 = vmatpush2.xpose.msra.mxu0 0.0
        %1375 = vmatprep.subr.mxu0 0.0
        %1376 = vmatpush2.xpose.msra.mxu0 0.0
        %1377 = vmatprep.subr.mxu0 0.0
        %1378 = vmatpush2.xpose.msra.mxu0 0.0
        %1379 = vmatprep.subr.mxu0 0.0
        %1380 = vmatpush2.xpose.msra.mxu0 0.0
        %1381 = vmatprep.subr.mxu0 0.0
        %1382 = vmatpush2.xpose.msra.mxu0 0.0
        %1383 = vmatprep.subr.mxu0 0.0
        %1384 = vmatpush2.xpose.msra.mxu0 0.0
        %1385 = vmatprep.subr.mxu0 0.0
        %1386 = vmatpush2.xpose.msra.mxu0 0.0
        %1387 = vmatprep.subr.mxu0 0.0
        %1388 = vmatpush2.xpose.msra.mxu0 0.0
        %1389 = vmatprep.subr.mxu0 0.0
        %1390 = vmatpush2.xpose.msra.mxu0 0.0
        %1391 = vmatprep.subr.mxu0 0.0
        %1392 = vmatpush2.xpose.msra.mxu0 0.0
        %1393 = vmatprep.subr.mxu0 0.0
        %1394 = vmatpush2.xpose.msra.mxu0 0.0
        %1395 = vmatprep.subr.mxu0 0.0
        %1396 = vmatpush2.xpose.msra.mxu0 0.0
        %1397 = vmatprep.subr.mxu0 0.0
        %1398 = vmatpush2.xpose.msra.mxu0 0.0
        %1399 = vmatprep.subr.mxu0 0.0
        %1400 = vmatpush2.xpose.msra.mxu0 0.0
        %1401 = vmatprep.subr.mxu0 0.0
        %1402 = vmatpush2.xpose.msra.mxu0 0.0
        %1403 = vmatprep.mubr.f32.mxu0 0.0
        %1404 = vmatmul.mubr.f32.gmra.mxu0 %v1335
        %v1405 = vpop.f32.mrf.mxu0
        %v1406 = vadd.f32 0.0, %v1405
        %v1407 = vpop.f32.mrf.mxu0
        %1408 = vdwg.mxu0
        %v1409 = vmul.f32 %v1406, 0.5
        %v1410 = vadd.f32 %v1409, %v572
        %v1411 = vsel %vm575, %v1410, -inf
        %1412 = vmax.xlane.f32.xlu0 %v1411
        %v1413 = vpop.xlane.xlu0 %1412
        %v1414 = vsub.f32 %v1410, %v1413
        %v1415 = vmul.f32 %v1414, 1.442695
        %v1416 = vpow.pop %v1415
        %v1417 = vsel %vm575, %v1416, 0.0
        %1418 = vadd.xlane.f32.xlu0 %v1417
        %v1419 = vpop.xlane.xlu0 %1418
        %v1420 = vrcp.pop %v1419
        %v1421 = vmul.f32 %v1416, %v1420
        %1422 = vrot.lane.b32.xlu0 %v481, 44
        %v1423 = vpop.permute.xlu0 %1422
        %v1426 = vsel %vm575, %v1421, 0
        %1428 = vmatprep.subr.mxu0 0.0
        %1429 = vmatpush1.msra.mxu0 0.0
        %1430 = vmatprep.subr.mxu0 0.0
        %1431 = vmatpush1.msra.mxu0 0.0
        %1432 = vmatprep.subr.mxu0 0.0
        %1433 = vmatpush1.msra.mxu0 0.0
        %1434 = vmatprep.subr.mxu0 0.0
        %1435 = vmatpush1.msra.mxu0 0.0
        %1436 = vmatprep.subr.mxu0 0.0
        %1437 = vmatpush1.msra.mxu0 0.0
        %1438 = vmatprep.subr.mxu0 0.0
        %1439 = vmatpush1.msra.mxu0 0.0
        %1440 = vmatprep.subr.mxu0 0.0
        %1441 = vmatpush1.msra.mxu0 0.0
        %1442 = vmatprep.subr.mxu0 0.0
        %1443 = vmatpush1.msra.mxu0 0.0
        %1444 = vmatprep.subr.mxu0 0.0
        %1445 = vmatpush1.msra.mxu0 0.0
        %1446 = vmatprep.subr.mxu0 0.0
        %1447 = vmatpush1.msra.mxu0 0.0
        %1448 = vmatprep.subr.mxu0 0.0
        %1449 = vmatpush1.msra.mxu0 0.0
        %1450 = vmatprep.subr.mxu0 0.0
        %1451 = vmatpush1.msra.mxu0 0.0
        %1452 = vmatprep.subr.mxu0 0.0
        %1453 = vmatpush1.msra.mxu0 0.0
        %1454 = vmatprep.subr.mxu0 0.0
        %1455 = vmatpush1.msra.mxu0 0.0
        %1456 = vmatprep.subr.mxu0 0.0
        %1457 = vmatpush1.msra.mxu0 0.0
        %1458 = vmatprep.subr.mxu0 0.0
        %1459 = vmatpush1.msra.mxu0 %v1423
        %1460 = vmatprep.subr.mxu0 0.0
        %1461 = vmatpush2.msra.mxu0 0.0
        %1462 = vmatprep.subr.mxu0 0.0
        %1463 = vmatpush2.msra.mxu0 0.0
        %1464 = vmatprep.subr.mxu0 0.0
        %1465 = vmatpush2.msra.mxu0 0.0
        %1466 = vmatprep.subr.mxu0 0.0
        %1467 = vmatpush2.msra.mxu0 0.0
        %1468 = vmatprep.subr.mxu0 0.0
        %1469 = vmatpush2.msra.mxu0 0.0
        %1470 = vmatprep.subr.mxu0 0.0
        %1471 = vmatpush2.msra.mxu0 0.0
        %1472 = vmatprep.subr.mxu0 0.0
        %1473 = vmatpush2.msra.mxu0 0.0
        %1474 = vmatprep.subr.mxu0 0.0
        %1475 = vmatpush2.msra.mxu0 0.0
        %1476 = vmatprep.subr.mxu0 0.0
        %1477 = vmatpush2.msra.mxu0 0.0
        %1478 = vmatprep.subr.mxu0 0.0
        %1479 = vmatpush2.msra.mxu0 0.0
        %1480 = vmatprep.subr.mxu0 0.0
        %1481 = vmatpush2.msra.mxu0 0.0
        %1482 = vmatprep.subr.mxu0 0.0
        %1483 = vmatpush2.msra.mxu0 0.0
        %1484 = vmatprep.subr.mxu0 0.0
        %1485 = vmatpush2.msra.mxu0 0.0
        %1486 = vmatprep.subr.mxu0 0.0
        %1487 = vmatpush2.msra.mxu0 0.0
        %1488 = vmatprep.subr.mxu0 0.0
        %1489 = vmatpush2.msra.mxu0 0.0
        %1490 = vmatprep.subr.mxu0 0.0
        %1491 = vmatpush2.msra.mxu0 0.0
        %1492 = vmatprep.mubr.f32.mxu0 0.0
        %1493 = vmatmul.mubr.f32.gmra.mxu0 %v1426
        %v1494 = vpop.f32.mrf.mxu0
        %v1495 = vadd.f32 0.0, %v1494
        %v1496 = vpop.f32.mrf.mxu0
        %1497 = vdwg.mxu0
        %1498 = vrot.lane.b32.xlu0 %v481, 104
        %v1499 = vpop.permute.xlu0 %1498
        %1500 = vrot.lane.b32.xlu0 %v481, 72
        %v1501 = vpop.permute.xlu0 %1500
        %v1502 = vsel %vm492, %v1499, 0
        %v1504 = vsel %vm492, %v1501, 0
        %1506 = vmatprep.subr.mxu0 0.0
        %1507 = vmatpush1.xpose.msra.mxu0 0.0
        %1508 = vmatprep.subr.mxu0 0.0
        %1509 = vmatpush1.xpose.msra.mxu0 0.0
        %1510 = vmatprep.subr.mxu0 0.0
        %1511 = vmatpush1.xpose.msra.mxu0 0.0
        %1512 = vmatprep.subr.mxu0 0.0
        %1513 = vmatpush1.xpose.msra.mxu0 0.0
        %1514 = vmatprep.subr.mxu0 0.0
        %1515 = vmatpush1.xpose.msra.mxu0 0.0
        %1516 = vmatprep.subr.mxu0 0.0
        %1517 = vmatpush1.xpose.msra.mxu0 0.0
        %1518 = vmatprep.subr.mxu0 0.0
        %1519 = vmatpush1.xpose.msra.mxu0 0.0
        %1520 = vmatprep.subr.mxu0 0.0
        %1521 = vmatpush1.xpose.msra.mxu0 0.0
        %1522 = vmatprep.subr.mxu0 0.0
        %1523 = vmatpush1.xpose.msra.mxu0 0.0
        %1524 = vmatprep.subr.mxu0 0.0
        %1525 = vmatpush1.xpose.msra.mxu0 0.0
        %1526 = vmatprep.subr.mxu0 0.0
        %1527 = vmatpush1.xpose.msra.mxu0 0.0
        %1528 = vmatprep.subr.mxu0 0.0
        %1529 = vmatpush1.xpose.msra.mxu0 0.0
        %1530 = vmatprep.subr.mxu0 0.0
        %1531 = vmatpush1.xpose.msra.mxu0 0.0
        %1532 = vmatprep.subr.mxu0 0.0
        %1533 = vmatpush1.xpose.msra.mxu0 0.0
        %1534 = vmatprep.subr.mxu0 0.0
        %1535 = vmatpush1.xpose.msra.mxu0 0.0
        %1536 = vmatprep.subr.mxu0 0.0
        %1537 = vmatpush1.xpose.msra.mxu0 %v1504
        %1538 = vmatprep.subr.mxu0 0.0
        %1539 = vmatpush2.xpose.msra.mxu0 0.0
        %1540 = vmatprep.subr.mxu0 0.0
        %1541 = vmatpush2.xpose.msra.mxu0 0.0
        %1542 = vmatprep.subr.mxu0 0.0
        %1543 = vmatpush2.xpose.msra.mxu0 0.0
        %1544 = vmatprep.subr.mxu0 0.0
        %1545 = vmatpush2.xpose.msra.mxu0 0.0
        %1546 = vmatprep.subr.mxu0 0.0
        %1547 = vmatpush2.xpose.msra.mxu0 0.0
        %1548 = vmatprep.subr.mxu0 0.0
        %1549 = vmatpush2.xpose.msra.mxu0 0.0
        %1550 = vmatprep.subr.mxu0 0.0
        %1551 = vmatpush2.xpose.msra.mxu0 0.0
        %1552 = vmatprep.subr.mxu0 0.0
        %1553 = vmatpush2.xpose.msra.mxu0 0.0
        %1554 = vmatprep.subr.mxu0 0.0
        %1555 = vmatpush2.xpose.msra.mxu0 0.0
        %1556 = vmatprep.subr.mxu0 0.0
        %1557 = vmatpush2.xpose.msra.mxu0 0.0
        %1558 = vmatprep.subr.mxu0 0.0
        %1559 = vmatpush2.xpose.msra.mxu0 0.0
        %1560 = vmatprep.subr.mxu0 0.0
        %1561 = vmatpush2.xpose.msra.mxu0 0.0
        %1562 = vmatprep.subr.mxu0 0.0
        %1563 = vmatpush2.xpose.msra.mxu0 0.0
        %1564 = vmatprep.subr.mxu0 0.0
        %1565 = vmatpush2.xpose.msra.mxu0 0.0
        %1566 = vmatprep.subr.mxu0 0.0
        %1567 = vmatpush2.xpose.msra.mxu0 0.0
        %1568 = vmatprep.subr.mxu0 0.0
        %1569 = vmatpush2.xpose.msra.mxu0 0.0
        %1570 = vmatprep.mubr.f32.mxu0 0.0
        %1571 = vmatmul.mubr.f32.gmra.mxu0 %v1502
        %v1572 = vpop.f32.mrf.mxu0
        %v1573 = vadd.f32 0.0, %v1572
        %v1574 = vpop.f32.mrf.mxu0
        %1575 = vdwg.mxu0
        %v1576 = vmul.f32 %v1573, 0.5
        %v1577 = vadd.f32 %v1576, %v572
        %v1578 = vsel %vm575, %v1577, -inf
        %1579 = vmax.xlane.f32.xlu0 %v1578
        %v1580 = vpop.xlane.xlu0 %1579
        %v1581 = vsub.f32 %v1577, %v1580
        %v1582 = vmul.f32 %v1581, 1.442695
        %v1583 = vpow.pop %v1582
        %v1584 = vsel %vm575, %v1583, 0.0
        %1585 = vadd.xlane.f32.xlu0 %v1584
        %v1586 = vpop.xlane.xlu0 %1585
        %v1587 = vrcp.pop %v1586
        %v1588 = vmul.f32 %v1583, %v1587
        %1589 = vrot.lane.b32.xlu0 %v481, 40
        %v1590 = vpop.permute.xlu0 %1589
        %v1593 = vsel %vm575, %v1588, 0
        %1595 = vmatprep.subr.mxu0 0.0
        %1596 = vmatpush1.msra.mxu0 0.0
        %1597 = vmatprep.subr.mxu0 0.0
        %1598 = vmatpush1.msra.mxu0 0.0
        %1599 = vmatprep.subr.mxu0 0.0
        %1600 = vmatpush1.msra.mxu0 0.0
        %1601 = vmatprep.subr.mxu0 0.0
        %1602 = vmatpush1.msra.mxu0 0.0
        %1603 = vmatprep.subr.mxu0 0.0
        %1604 = vmatpush1.msra.mxu0 0.0
        %1605 = vmatprep.subr.mxu0 0.0
        %1606 = vmatpush1.msra.mxu0 0.0
        %1607 = vmatprep.subr.mxu0 0.0
        %1608 = vmatpush1.msra.mxu0 0.0
        %1609 = vmatprep.subr.mxu0 0.0
        %1610 = vmatpush1.msra.mxu0 0.0
        %1611 = vmatprep.subr.mxu0 0.0
        %1612 = vmatpush1.msra.mxu0 0.0
        %1613 = vmatprep.subr.mxu0 0.0
        %1614 = vmatpush1.msra.mxu0 0.0
        %1615 = vmatprep.subr.mxu0 0.0
        %1616 = vmatpush1.msra.mxu0 0.0
        %1617 = vmatprep.subr.mxu0 0.0
        %1618 = vmatpush1.msra.mxu0 0.0
        %1619 = vmatprep.subr.mxu0 0.0
        %1620 = vmatpush1.msra.mxu0 0.0
        %1621 = vmatprep.subr.mxu0 0.0
        %1622 = vmatpush1.msra.mxu0 0.0
        %1623 = vmatprep.subr.mxu0 0.0
        %1624 = vmatpush1.msra.mxu0 0.0
        %1625 = vmatprep.subr.mxu0 0.0
        %1626 = vmatpush1.msra.mxu0 %v1590
        %1627 = vmatprep.subr.mxu0 0.0
        %1628 = vmatpush2.msra.mxu0 0.0
        %1629 = vmatprep.subr.mxu0 0.0
        %1630 = vmatpush2.msra.mxu0 0.0
        %1631 = vmatprep.subr.mxu0 0.0
        %1632 = vmatpush2.msra.mxu0 0.0
        %1633 = vmatprep.subr.mxu0 0.0
        %1634 = vmatpush2.msra.mxu0 0.0
        %1635 = vmatprep.subr.mxu0 0.0
        %1636 = vmatpush2.msra.mxu0 0.0
        %1637 = vmatprep.subr.mxu0 0.0
        %1638 = vmatpush2.msra.mxu0 0.0
        %1639 = vmatprep.subr.mxu0 0.0
        %1640 = vmatpush2.msra.mxu0 0.0
        %1641 = vmatprep.subr.mxu0 0.0
        %1642 = vmatpush2.msra.mxu0 0.0
        %1643 = vmatprep.subr.mxu0 0.0
        %1644 = vmatpush2.msra.mxu0 0.0
        %1645 = vmatprep.subr.mxu0 0.0
        %1646 = vmatpush2.msra.mxu0 0.0
        %1647 = vmatprep.subr.mxu0 0.0
        %1648 = vmatpush2.msra.mxu0 0.0
        %1649 = vmatprep.subr.mxu0 0.0
        %1650 = vmatpush2.msra.mxu0 0.0
        %1651 = vmatprep.subr.mxu0 0.0
        %1652 = vmatpush2.msra.mxu0 0.0
        %1653 = vmatprep.subr.mxu0 0.0
        %1654 = vmatpush2.msra.mxu0 0.0
        %1655 = vmatprep.subr.mxu0 0.0
        %1656 = vmatpush2.msra.mxu0 0.0
        %1657 = vmatprep.subr.mxu0 0.0
        %1658 = vmatpush2.msra.mxu0 0.0
        %1659 = vmatprep.mubr.f32.mxu0 0.0
        %1660 = vmatmul.mubr.f32.gmra.mxu0 %v1593
        %v1661 = vpop.f32.mrf.mxu0
        %v1662 = vadd.f32 0.0, %v1661
        %v1663 = vpop.f32.mrf.mxu0
        %1664 = vdwg.mxu0
        %1665 = vrot.lane.b32.xlu0 %v481, 100
        %v1666 = vpop.permute.xlu0 %1665
        %1667 = vrot.lane.b32.xlu0 %v481, 68
        %v1668 = vpop.permute.xlu0 %1667
        %v1669 = vsel %vm492, %v1666, 0
        %v1671 = vsel %vm492, %v1668, 0
        %1673 = vmatprep.subr.mxu0 0.0
        %1674 = vmatpush1.xpose.msra.mxu0 0.0
        %1675 = vmatprep.subr.mxu0 0.0
        %1676 = vmatpush1.xpose.msra.mxu0 0.0
        %1677 = vmatprep.subr.mxu0 0.0
        %1678 = vmatpush1.xpose.msra.mxu0 0.0
        %1679 = vmatprep.subr.mxu0 0.0
        %1680 = vmatpush1.xpose.msra.mxu0 0.0
        %1681 = vmatprep.subr.mxu0 0.0
        %1682 = vmatpush1.xpose.msra.mxu0 0.0
        %1683 = vmatprep.subr.mxu0 0.0
        %1684 = vmatpush1.xpose.msra.mxu0 0.0
        %1685 = vmatprep.subr.mxu0 0.0
        %1686 = vmatpush1.xpose.msra.mxu0 0.0
        %1687 = vmatprep.subr.mxu0 0.0
        %1688 = vmatpush1.xpose.msra.mxu0 0.0
        %1689 = vmatprep.subr.mxu0 0.0
        %1690 = vmatpush1.xpose.msra.mxu0 0.0
        %1691 = vmatprep.subr.mxu0 0.0
        %1692 = vmatpush1.xpose.msra.mxu0 0.0
        %1693 = vmatprep.subr.mxu0 0.0
        %1694 = vmatpush1.xpose.msra.mxu0 0.0
        %1695 = vmatprep.subr.mxu0 0.0
        %1696 = vmatpush1.xpose.msra.mxu0 0.0
        %1697 = vmatprep.subr.mxu0 0.0
        %1698 = vmatpush1.xpose.msra.mxu0 0.0
        %1699 = vmatprep.subr.mxu0 0.0
        %1700 = vmatpush1.xpose.msra.mxu0 0.0
        %1701 = vmatprep.subr.mxu0 0.0
        %1702 = vmatpush1.xpose.msra.mxu0 0.0
        %1703 = vmatprep.subr.mxu0 0.0
        %1704 = vmatpush1.xpose.msra.mxu0 %v1671
        %1705 = vmatprep.subr.mxu0 0.0
        %1706 = vmatpush2.xpose.msra.mxu0 0.0
        %1707 = vmatprep.subr.mxu0 0.0
        %1708 = vmatpush2.xpose.msra.mxu0 0.0
        %1709 = vmatprep.subr.mxu0 0.0
        %1710 = vmatpush2.xpose.msra.mxu0 0.0
        %1711 = vmatprep.subr.mxu0 0.0
        %1712 = vmatpush2.xpose.msra.mxu0 0.0
        %1713 = vmatprep.subr.mxu0 0.0
        %1714 = vmatpush2.xpose.msra.mxu0 0.0
        %1715 = vmatprep.subr.mxu0 0.0
        %1716 = vmatpush2.xpose.msra.mxu0 0.0
        %1717 = vmatprep.subr.mxu0 0.0
        %1718 = vmatpush2.xpose.msra.mxu0 0.0
        %1719 = vmatprep.subr.mxu0 0.0
        %1720 = vmatpush2.xpose.msra.mxu0 0.0
        %1721 = vmatprep.subr.mxu0 0.0
        %1722 = vmatpush2.xpose.msra.mxu0 0.0
        %1723 = vmatprep.subr.mxu0 0.0
        %1724 = vmatpush2.xpose.msra.mxu0 0.0
        %1725 = vmatprep.subr.mxu0 0.0
        %1726 = vmatpush2.xpose.msra.mxu0 0.0
        %1727 = vmatprep.subr.mxu0 0.0
        %1728 = vmatpush2.xpose.msra.mxu0 0.0
        %1729 = vmatprep.subr.mxu0 0.0
        %1730 = vmatpush2.xpose.msra.mxu0 0.0
        %1731 = vmatprep.subr.mxu0 0.0
        %1732 = vmatpush2.xpose.msra.mxu0 0.0
        %1733 = vmatprep.subr.mxu0 0.0
        %1734 = vmatpush2.xpose.msra.mxu0 0.0
        %1735 = vmatprep.subr.mxu0 0.0
        %1736 = vmatpush2.xpose.msra.mxu0 0.0
        %1737 = vmatprep.mubr.f32.mxu0 0.0
        %1738 = vmatmul.mubr.f32.gmra.mxu0 %v1669
        %v1739 = vpop.f32.mrf.mxu0
        %v1740 = vadd.f32 0.0, %v1739
        %v1741 = vpop.f32.mrf.mxu0
        %1742 = vdwg.mxu0
        %v1743 = vmul.f32 %v1740, 0.5
        %v1744 = vadd.f32 %v1743, %v572
        %v1745 = vsel %vm575, %v1744, -inf
        %1746 = vmax.xlane.f32.xlu0 %v1745
        %v1747 = vpop.xlane.xlu0 %1746
        %v1748 = vsub.f32 %v1744, %v1747
        %v1749 = vmul.f32 %v1748, 1.442695
        %v1750 = vpow.pop %v1749
        %v1751 = vsel %vm575, %v1750, 0.0
        %1752 = vadd.xlane.f32.xlu0 %v1751
        %v1753 = vpop.xlane.xlu0 %1752
        %v1754 = vrcp.pop %v1753
        %v1755 = vmul.f32 %v1750, %v1754
        %1756 = vrot.lane.b32.xlu0 %v481, 36
        %v1757 = vpop.permute.xlu0 %1756
        %v1760 = vsel %vm575, %v1755, 0
        %1762 = vmatprep.subr.mxu0 0.0
        %1763 = vmatpush1.msra.mxu0 0.0
        %1764 = vmatprep.subr.mxu0 0.0
        %1765 = vmatpush1.msra.mxu0 0.0
        %1766 = vmatprep.subr.mxu0 0.0
        %1767 = vmatpush1.msra.mxu0 0.0
        %1768 = vmatprep.subr.mxu0 0.0
        %1769 = vmatpush1.msra.mxu0 0.0
        %1770 = vmatprep.subr.mxu0 0.0
        %1771 = vmatpush1.msra.mxu0 0.0
        %1772 = vmatprep.subr.mxu0 0.0
        %1773 = vmatpush1.msra.mxu0 0.0
        %1774 = vmatprep.subr.mxu0 0.0
        %1775 = vmatpush1.msra.mxu0 0.0
        %1776 = vmatprep.subr.mxu0 0.0
        %1777 = vmatpush1.msra.mxu0 0.0
        %1778 = vmatprep.subr.mxu0 0.0
        %1779 = vmatpush1.msra.mxu0 0.0
        %1780 = vmatprep.subr.mxu0 0.0
        %1781 = vmatpush1.msra.mxu0 0.0
        %1782 = vmatprep.subr.mxu0 0.0
        %1783 = vmatpush1.msra.mxu0 0.0
        %1784 = vmatprep.subr.mxu0 0.0
        %1785 = vmatpush1.msra.mxu0 0.0
        %1786 = vmatprep.subr.mxu0 0.0
        %1787 = vmatpush1.msra.mxu0 0.0
        %1788 = vmatprep.subr.mxu0 0.0
        %1789 = vmatpush1.msra.mxu0 0.0
        %1790 = vmatprep.subr.mxu0 0.0
        %1791 = vmatpush1.msra.mxu0 0.0
        %1792 = vmatprep.subr.mxu0 0.0
        %1793 = vmatpush1.msra.mxu0 %v1757
        %1794 = vmatprep.subr.mxu0 0.0
        %1795 = vmatpush2.msra.mxu0 0.0
        %1796 = vmatprep.subr.mxu0 0.0
        %1797 = vmatpush2.msra.mxu0 0.0
        %1798 = vmatprep.subr.mxu0 0.0
        %1799 = vmatpush2.msra.mxu0 0.0
        %1800 = vmatprep.subr.mxu0 0.0
        %1801 = vmatpush2.msra.mxu0 0.0
        %1802 = vmatprep.subr.mxu0 0.0
        %1803 = vmatpush2.msra.mxu0 0.0
        %1804 = vmatprep.subr.mxu0 0.0
        %1805 = vmatpush2.msra.mxu0 0.0
        %1806 = vmatprep.subr.mxu0 0.0
        %1807 = vmatpush2.msra.mxu0 0.0
        %1808 = vmatprep.subr.mxu0 0.0
        %1809 = vmatpush2.msra.mxu0 0.0
        %1810 = vmatprep.subr.mxu0 0.0
        %1811 = vmatpush2.msra.mxu0 0.0
        %1812 = vmatprep.subr.mxu0 0.0
        %1813 = vmatpush2.msra.mxu0 0.0
        %1814 = vmatprep.subr.mxu0 0.0
        %1815 = vmatpush2.msra.mxu0 0.0
        %1816 = vmatprep.subr.mxu0 0.0
        %1817 = vmatpush2.msra.mxu0 0.0
        %1818 = vmatprep.subr.mxu0 0.0
        %1819 = vmatpush2.msra.mxu0 0.0
        %1820 = vmatprep.subr.mxu0 0.0
        %1821 = vmatpush2.msra.mxu0 0.0
        %1822 = vmatprep.subr.mxu0 0.0
        %1823 = vmatpush2.msra.mxu0 0.0
        %1824 = vmatprep.subr.mxu0 0.0
        %1825 = vmatpush2.msra.mxu0 0.0
        %1826 = vmatprep.mubr.f32.mxu0 0.0
        %1827 = vmatmul.mubr.f32.gmra.mxu0 %v1760
        %v1828 = vpop.f32.mrf.mxu0
        %v1829 = vadd.f32 0.0, %v1828
        %v1830 = vpop.f32.mrf.mxu0
        %1831 = vdwg.mxu0
        %1833 = vrot.lane.b32.xlu0 %v827, 4
        %v1834 = vpop.permute.xlu0 %1833
        %1837 = vrot.lane.b32.xlu0 %v994, 8
        %v1838 = vpop.permute.xlu0 %1837
        %1841 = vrot.lane.b32.xlu0 %v1161, 12
        %v1842 = vpop.permute.xlu0 %1841
        %1845 = vrot.lane.b32.xlu0 %v1328, 16
        %v1846 = vpop.permute.xlu0 %1845
        %1849 = vrot.lane.b32.xlu0 %v1495, 20
        %v1850 = vpop.permute.xlu0 %1849
        %1853 = vrot.lane.b32.xlu0 %v1662, 24
        %v1854 = vpop.permute.xlu0 %1853
        %1857 = vrot.lane.b32.xlu0 %v1829, 28
        %v1858 = vpop.permute.xlu0 %1857
        %v1860 = vsel %vm492, %v660, %v1834
        %v1861 = vsel %vm575, %v1860, %v1838
        %vm1862 = vcmask 97280
        %v1863 = vsel %vm1862, %v1861, %v1842
        %vm1864 = vcmask 130048
        %v1865 = vsel %vm1864, %v1863, %v1846
        %vm1866 = vcmask 162816
        %v1867 = vsel %vm1866, %v1865, %v1850
        %vm1868 = vcmask 195584
        %v1869 = vsel %vm1868, %v1867, %v1854
        %vm1870 = vcmask 228352
        %v1871 = vsel %vm1870, %v1869, %v1858
        %v1872 = vpack.c.bf16 %v1871, %v1871
        %v1873 = vld [vmem:[%s4] sm:$0xf]
        %v1874 = vld [vmem:[%s4 + $0x4] sm:$0xf]
        %v1875 = vld [vmem:[%s4 + $0x8] sm:$0xf]
        %v1876 = vld [vmem:[%s4 + $0xc] sm:$0xf]
        %v1877 = vlaneseq
        %v1878 = vshrl.u32 %v1877, 7
        %v1879 = vsub.s32 6, %v1878
        %v1880 = vrot.slane %v417, %v1879
        %v1885 = vunpack.c.l.b16 %v1873
        %v1886 = vunpack.c.l.b16 %v1874
        %v1887 = vunpack.c.l.b16 %v1875
        %v1888 = vunpack.c.l.b16 %v1876
        %v1889 = vpack.c.b16 %v1886, %v1885
        %v1890 = vpack.c.b16 %v1888, %v1887
        %v1894 = vsel %vm442, %v1872, 0
        %1896 = vmatprep.subr.bf16.mxu0 0
        %1897 = vmatpush1.bf16.msra.mxu0 0
        %1898 = vmatprep.subr.bf16.mxu0 0
        %1899 = vmatpush1.bf16.msra.mxu0 0
        %1900 = vmatprep.subr.bf16.mxu0 0
        %1901 = vmatpush1.bf16.msra.mxu0 0
        %1902 = vmatprep.subr.bf16.mxu0 0
        %1903 = vmatpush1.bf16.msra.mxu0 0
        %1904 = vmatprep.subr.bf16.mxu0 0
        %1905 = vmatpush1.bf16.msra.mxu0 0
        %1906 = vmatprep.subr.bf16.mxu0 0
        %1907 = vmatpush1.bf16.msra.mxu0 0
        %1908 = vmatprep.subr.bf16.mxu0 0
        %1909 = vmatpush1.bf16.msra.mxu0 %v1890
        %1910 = vmatprep.subr.bf16.mxu0 0
        %1911 = vmatpush1.bf16.msra.mxu0 %v1889
        %1912 = vmatprep.subr.bf16.mxu0 0
        %1913 = vmatpush2.bf16.msra.mxu0 0
        %1914 = vmatprep.subr.bf16.mxu0 0
        %1915 = vmatpush2.bf16.msra.mxu0 0
        %1916 = vmatprep.subr.bf16.mxu0 0
        %1917 = vmatpush2.bf16.msra.mxu0 0
        %1918 = vmatprep.subr.bf16.mxu0 0
        %1919 = vmatpush2.bf16.msra.mxu0 0
        %1920 = vmatprep.subr.bf16.mxu0 0
        %1921 = vmatpush2.bf16.msra.mxu0 0
        %1922 = vmatprep.subr.bf16.mxu0 0
        %1923 = vmatpush2.bf16.msra.mxu0 0
        %1924 = vmatprep.subr.bf16.mxu0 0
        %1925 = vmatpush2.bf16.msra.mxu0 0
        %1926 = vmatprep.subr.bf16.mxu0 0
        %1927 = vmatpush2.bf16.msra.mxu0 0
        %1928 = vmatprep.mubr.bf16.mxu0 0
        %1929 = vmatmul.mubr.bf16.gmra.mxu0 %v1894
        %v1930 = vpop.f32.mrf.mxu0
        %v1931 = vadd.f32 %v1880, %v1930
        %v1932 = vpop.f32.mrf.mxu0
        %v1933 = vpop.f32.mrf.mxu0
        %v1934 = vpop.f32.mrf.mxu0
        %1935 = vdwg.mxu0
        %v1936 = vadd.f32 %v416, %v1931
        %v1937 = vsel %vm442, %v1936, 0.0
        %1938 = vadd.xlane.f32.xlu0 %v1937
        %v1939 = vpop.xlane.xlu0 %1938
        %v1940 = vrcp.pop 32.0
        %v1941 = vmul.f32 %v1939, %v1940
        %v1942 = vsub.f32 %v1936, %v1941
        %v1943 = vmul.f32 %v1942, %v1942
        %v1944 = vsel %vm442, %v1943, 0.0
        %1945 = vadd.xlane.f32.xlu0 %v1944
        %v1946 = vpop.xlane.xlu0 %1945
        %v1947 = vmul.f32 %v1946, %v1940
        %v1948 = vadd.f32 %v1947, 1e-05
        %v1949 = vrsqrt.pop %v1948
        %v1950 = vmul.f32 %v1942, %v1949
        %v1951 = vlaneseq
        %v1952 = vshrl.u32 %v1951, 7
        %v1953 = vsub.s32 0, %v1952
        %v1954 = vrot.slane %v417, %v1953
        %v1955 = vmul.f32 %v1950, %v1954
        %v1956 = vlaneseq
        %v1957 = vshrl.u32 %v1956, 7
        %v1958 = vsub.s32 1, %v1957
        %v1959 = vrot.slane %v417, %v1958
        %v1960 = vadd.f32 %v1955, %v1959
        %v1961 = vpack.c.bf16 %v1960, %v1960
        %v1962 = vld [vmem:[%s6] sm:$0xf]
        %v1963 = vld [vmem:[%s6 + $0x4] sm:$0xf]
        %v1964 = vld [vmem:[%s6 + $0x8] sm:$0xf]
        %v1965 = vld [vmem:[%s6 + $0xc] sm:$0xf]
        %v1966 = vld [vmem:[%s7] sm:$0x1]
        %v1968 = vlaneseq
        %v1969 = vshrl.u32 %v1968, 7
        %v1970 = vsub.s32 0, %v1969
        %v1971 = vrot.slane %v1966, %v1970
        %v1977 = vunpack.c.l.b16 %v1962
        %v1978 = vunpack.c.l.b16 %v1963
        %v1979 = vunpack.c.l.b16 %v1964
        %v1980 = vunpack.c.l.b16 %v1965
        %v1981 = vpack.c.b16 %v1978, %v1977
        %v1982 = vpack.c.b16 %v1980, %v1979
        %v1986 = vsel %vm442, %v1961, 0
        %1988 = vmatprep.subr.bf16.mxu0 0
        %1989 = vmatpush1.bf16.msra.mxu0 0
        %1990 = vmatprep.subr.bf16.mxu0 0
        %1991 = vmatpush1.bf16.msra.mxu0 0
        %1992 = vmatprep.subr.bf16.mxu0 0
        %1993 = vmatpush1.bf16.msra.mxu0 0
        %1994 = vmatprep.subr.bf16.mxu0 0
        %1995 = vmatpush1.bf16.msra.mxu0 0
        %1996 = vmatprep.subr.bf16.mxu0 0
        %1997 = vmatpush1.bf16.msra.mxu0 0
        %1998 = vmatprep.subr.bf16.mxu0 0
        %1999 = vmatpush1.bf16.msra.mxu0 0
        %2000 = vmatprep.subr.bf16.mxu0 0
        %2001 = vmatpush1.bf16.msra.mxu0 %v1982
        %2002 = vmatprep.subr.bf16.mxu0 0
        %2003 = vmatpush1.bf16.msra.mxu0 %v1981
        %2004 = vmatprep.subr.bf16.mxu0 0
        %2005 = vmatpush2.bf16.msra.mxu0 0
        %2006 = vmatprep.subr.bf16.mxu0 0
        %2007 = vmatpush2.bf16.msra.mxu0 0
        %2008 = vmatprep.subr.bf16.mxu0 0
        %2009 = vmatpush2.bf16.msra.mxu0 0
        %2010 = vmatprep.subr.bf16.mxu0 0
        %2011 = vmatpush2.bf16.msra.mxu0 0
        %2012 = vmatprep.subr.bf16.mxu0 0
        %2013 = vmatpush2.bf16.msra.mxu0 0
        %2014 = vmatprep.subr.bf16.mxu0 0
        %2015 = vmatpush2.bf16.msra.mxu0 0
        %2016 = vmatprep.subr.bf16.mxu0 0
        %2017 = vmatpush2.bf16.msra.mxu0 0
        %2018 = vmatprep.subr.bf16.mxu0 0
        %2019 = vmatpush2.bf16.msra.mxu0 0
        %2020 = vmatprep.mubr.bf16.mxu0 0
        %2021 = vmatmul.mubr.bf16.gmra.mxu0 %v1986
        %v2022 = vpop.f32.mrf.mxu0
        %v2023 = vadd.f32 %v1971, %v2022
        %v2024 = vpop.f32.mrf.mxu0
        %v2025 = vpop.f32.mrf.mxu0
        %v2026 = vpop.f32.mrf.mxu0
        %2027 = vdwg.mxu0
        %v2028 = vmax.f32 %v2023, 0.0
        %v2029 = vpack.c.bf16 %v2028, %v2028
        %v2030 = vld [vmem:[%s8] sm:$0xf]
        %v2031 = vld [vmem:[%s8 + $0x4] sm:$0xf]
        %v2032 = vld [vmem:[%s8 + $0x8] sm:$0xf]
        %v2033 = vld [vmem:[%s8 + $0xc] sm:$0xf]
        %v2034 = vld [vmem:[%s8 + $0x10] sm:$0xf]
        %v2035 = vld [vmem:[%s8 + $0x14] sm:$0xf]
        %v2036 = vld [vmem:[%s8 + $0x18] sm:$0xf]
        %v2037 = vld [vmem:[%s8 + $0x1c] sm:$0xf]
        %v2038 = vld [vmem:[%s8 + $0x20] sm:$0xf]
        %v2039 = vld [vmem:[%s8 + $0x24] sm:$0xf]
        %v2040 = vld [vmem:[%s8 + $0x28] sm:$0xf]
        %v2041 = vld [vmem:[%s8 + $0x2c] sm:$0xf]
        %v2042 = vld [vmem:[%s8 + $0x30] sm:$0xf]
        %v2043 = vld [vmem:[%s8 + $0x34] sm:$0xf]
        %v2044 = vld [vmem:[%s8 + $0x38] sm:$0xf]
        %v2045 = vld [vmem:[%s8 + $0x3c] sm:$0xf]
        %v2046 = vlaneseq
        %v2047 = vshrl.u32 %v2046, 7
        %v2048 = vsub.s32 7, %v2047
        %v2049 = vrot.slane %v417, %v2048
        %v2066 = vunpack.c.l.b16 %v2030
        %v2067 = vunpack.c.l.b16 %v2031
        %v2068 = vunpack.c.l.b16 %v2032
        %v2069 = vunpack.c.l.b16 %v2033
        %v2070 = vunpack.c.l.b16 %v2034
        %v2071 = vunpack.c.l.b16 %v2035
        %v2072 = vunpack.c.l.b16 %v2036
        %v2073 = vunpack.c.l.b16 %v2037
        %v2074 = vunpack.c.l.b16 %v2038
        %v2075 = vunpack.c.l.b16 %v2039
        %v2076 = vunpack.c.l.b16 %v2040
        %v2077 = vunpack.c.l.b16 %v2041
        %v2078 = vunpack.c.l.b16 %v2042
        %v2079 = vunpack.c.l.b16 %v2043
        %v2080 = vunpack.c.l.b16 %v2044
        %v2081 = vunpack.c.l.b16 %v2045
        %v2082 = vpack.c.b16 %v2067, %v2066
        %v2083 = vpack.c.b16 %v2069, %v2068
        %v2084 = vpack.c.b16 %v2071, %v2070
        %v2085 = vpack.c.b16 %v2073, %v2072
        %v2086 = vpack.c.b16 %v2075, %v2074
        %v2087 = vpack.c.b16 %v2077, %v2076
        %v2088 = vpack.c.b16 %v2079, %v2078
        %v2089 = vpack.c.b16 %v2081, %v2080
        %2098 = vmatprep.subr.bf16.mxu0 0
        %2099 = vmatpush1.bf16.msra.mxu0 %v2089
        %2100 = vmatprep.subr.bf16.mxu0 0
        %2101 = vmatpush1.bf16.msra.mxu0 %v2088
        %2102 = vmatprep.subr.bf16.mxu0 0
        %2103 = vmatpush1.bf16.msra.mxu0 %v2087
        %2104 = vmatprep.subr.bf16.mxu0 0
        %2105 = vmatpush1.bf16.msra.mxu0 %v2086
        %2106 = vmatprep.subr.bf16.mxu0 0
        %2107 = vmatpush1.bf16.msra.mxu0 %v2085
        %2108 = vmatprep.subr.bf16.mxu0 0
        %2109 = vmatpush1.bf16.msra.mxu0 %v2084
        %2110 = vmatprep.subr.bf16.mxu0 0
        %2111 = vmatpush1.bf16.msra.mxu0 %v2083
        %2112 = vmatprep.subr.bf16.mxu0 0
        %2113 = vmatpush1.bf16.msra.mxu0 %v2082
        %2114 = vmatprep.subr.bf16.mxu0 0
        %2115 = vmatpush2.bf16.msra.mxu0 0
        %2116 = vmatprep.subr.bf16.mxu0 0
        %2117 = vmatpush2.bf16.msra.mxu0 0
        %2118 = vmatprep.subr.bf16.mxu0 0
        %2119 = vmatpush2.bf16.msra.mxu0 0
        %2120 = vmatprep.subr.bf16.mxu0 0
        %2121 = vmatpush2.bf16.msra.mxu0 0
        %2122 = vmatprep.subr.bf16.mxu0 0
        %2123 = vmatpush2.bf16.msra.mxu0 0
        %2124 = vmatprep.subr.bf16.mxu0 0
        %2125 = vmatpush2.bf16.msra.mxu0 0
        %2126 = vmatprep.subr.bf16.mxu0 0
        %2127 = vmatpush2.bf16.msra.mxu0 0
        %2128 = vmatprep.subr.bf16.mxu0 0
        %2129 = vmatpush2.bf16.msra.mxu0 0
        %2130 = vmatprep.mubr.bf16.mxu0 0
        %2131 = vmatmul.mubr.bf16.gmra.mxu0 %v2029
        %v2132 = vpop.f32.mrf.mxu0
        %v2133 = vadd.f32 %v2049, %v2132
        %v2134 = vpop.f32.mrf.mxu0
        %v2135 = vpop.f32.mrf.mxu0
        %v2136 = vpop.f32.mrf.mxu0
        %2137 = vdwg.mxu0
        %v2138 = vadd.f32 %v1960, %v2133
        %v2139 = vsel %vm442, %v2138, 0.0
        %2140 = vadd.xlane.f32.xlu0 %v2139
        %v2141 = vpop.xlane.xlu0 %2140
        %v2142 = vmul.f32 %v2141, %v1940
        %v2143 = vsub.f32 %v2138, %v2142
        %v2144 = vmul.f32 %v2143, %v2143
        %v2145 = vsel %vm442, %v2144, 0.0
        %2146 = vadd.xlane.f32.xlu0 %v2145
        %v2147 = vpop.xlane.xlu0 %2146
        %v2148 = vmul.f32 %v2147, %v1940
        %v2149 = vadd.f32 %v2148, 1e-05
        %v2150 = vrsqrt.pop %v2149
        %v2151 = vmul.f32 %v2143, %v2150
        %v2152 = vlaneseq
        %v2153 = vshrl.u32 %v2152, 7
        %v2154 = vsub.s32 2, %v2153
        %v2155 = vrot.slane %v417, %v2154
        %v2156 = vmul.f32 %v2151, %v2155
        %v2157 = vlaneseq
        %v2158 = vshrl.u32 %v2157, 7
        %v2159 = vsub.s32 3, %v2158
        %v2160 = vrot.slane %v417, %v2159
        %v2161 = vadd.f32 %v2156, %v2160
        %vm2162 = vcmask 261127
        %v2163 = vsel %vm2162, %v2161, 0.0
        %2164 = vadd.xlane.f32.xlu0 %v2163
        %v2165 = vpop.xlane.xlu0 %2164
        %v2166 = vmul.f32 %v2165, %v1940
        %v2167 = vsub.f32 %v2161, %v2166
        %v2168 = vmul.f32 %v2167, %v2167
        %v2169 = vsel %vm2162, %v2168, 0.0
        %2170 = vadd.xlane.f32.xlu0 %v2169
        %v2171 = vpop.xlane.xlu0 %2170
        %v2172 = vmul.f32 %v2171, %v1940
        %v2173 = vadd.f32 %v2172, 1e-05
        %v2174 = vrsqrt.pop %v2173
        %v2175 = vmul.f32 %v2167, %v2174
        %v2177 = vrot.slane %v417, 5
        %v2179 = vmul.f32 %v2175, %v2177
        %v2180 = vrot.slane %v417, 6
        %v2182 = vadd.f32 %v2179, %v2180
        %v2183 = vpack.c.bf16 %v2182, %v2182
        %v2184 = vld [vmem:[%s9] sm:$0xf]
        %v2185 = vld [vmem:[%s9 + $0x4] sm:$0xf]
        %v2186 = vld [vmem:[%s9 + $0x8] sm:$0xf]
        %v2187 = vld [vmem:[%s9 + $0xc] sm:$0xf]
        %v2188 = vld [vmem:[%s10] sm:$0x1]
        %v2190 = vshrl.u32 %v2183, 16
        %v2192 = vrot.slane %v2190, 3
        %v2197 = vunpack.c.l.b16 %v2184
        %v2198 = vunpack.c.l.b16 %v2185
        %v2199 = vunpack.c.l.b16 %v2186
        %v2200 = vunpack.c.l.b16 %v2187
        %v2201 = vpack.c.b16 %v2198, %v2197
        %v2202 = vpack.c.b16 %v2200, %v2199
        %v2206 = vsel %vm442, %v2192, 0
        %2208 = vmatprep.subr.bf16.mxu0 0
        %2209 = vmatpush1.bf16.msra.mxu0 0
        %2210 = vmatprep.subr.bf16.mxu0 0
        %2211 = vmatpush1.bf16.msra.mxu0 0
        %2212 = vmatprep.subr.bf16.mxu0 0
        %2213 = vmatpush1.bf16.msra.mxu0 0
        %2214 = vmatprep.subr.bf16.mxu0 0
        %2215 = vmatpush1.bf16.msra.mxu0 0
        %2216 = vmatprep.subr.bf16.mxu0 0
        %2217 = vmatpush1.bf16.msra.mxu0 0
        %2218 = vmatprep.subr.bf16.mxu0 0
        %2219 = vmatpush1.bf16.msra.mxu0 0
        %2220 = vmatprep.subr.bf16.mxu0 0
        %2221 = vmatpush1.bf16.msra.mxu0 %v2202
        %2222 = vmatprep.subr.bf16.mxu0 0
        %2223 = vmatpush1.bf16.msra.mxu0 %v2201
        %2224 = vmatprep.subr.bf16.mxu0 0
        %2225 = vmatpush2.bf16.msra.mxu0 0
        %2226 = vmatprep.subr.bf16.mxu0 0
        %2227 = vmatpush2.bf16.msra.mxu0 0
        %2228 = vmatprep.subr.bf16.mxu0 0
        %2229 = vmatpush2.bf16.msra.mxu0 0
        %2230 = vmatprep.subr.bf16.mxu0 0
        %2231 = vmatpush2.bf16.msra.mxu0 0
        %2232 = vmatprep.subr.bf16.mxu0 0
        %2233 = vmatpush2.bf16.msra.mxu0 0
        %2234 = vmatprep.subr.bf16.mxu0 0
        %2235 = vmatpush2.bf16.msra.mxu0 0
        %2236 = vmatprep.subr.bf16.mxu0 0
        %2237 = vmatpush2.bf16.msra.mxu0 0
        %2238 = vmatprep.subr.bf16.mxu0 0
        %2239 = vmatpush2.bf16.msra.mxu0 0
        %2240 = vmatprep.mubr.bf16.mxu0 0
        %2241 = vmatmul.mubr.bf16.gmra.mxu0 %v2206
        %v2242 = vpop.f32.mrf.mxu0
        %v2243 = vadd.f32 %v2188, %v2242
        %v2244 = vpop.f32.mrf.mxu0
        %v2245 = vpop.f32.mrf.mxu0
        %v2246 = vpop.f32.mrf.mxu0
        %2247 = vdwg.mxu0
        %vm2248 = vcmask 1040384
        %v2249 = vsel %vm2248, %v2243, -inf
        %2250 = vmax.xlane.f32.xlu0 %v2249
        %v2251 = vpop.xlane.xlu0 %2250
        %v2252 = vsub.f32 %v2243, %v2251
        %v2253 = vmul.f32 %v2252, 1.442695
        %v2254 = vpow.pop %v2253
        %v2255 = vsel %vm2248, %v2254, 0.0
        %2256 = vadd.xlane.f32.xlu0 %v2255
        %v2257 = vpop.xlane.xlu0 %2256
        %v2258 = vrcp.pop %v2257
        %v2259 = vmul.f32 %v2254, %v2258
        %2260 = vst [vmem:[%s410] sm:$0x1] %v2259
        %s2261 = sand.u32 %s277, 1
        %s2262 = scalar_lea.sflag [#allocation4], %s2261
        %s2263 = sand.u32 %s277, 1
        %s2264 = scalar_lea.vmem [#allocation5], %s2263
        // Predicated region
        $region69: #{tpu_custom_call.1} parent=63 // pred_check
          %p2265 = pneg %p287
        $region70: #{tpu_custom_call.1} parent=63 // pred_check_branch
          %2267 = sbr.rel (%p2265) target = $region72
        $region71: #{tpu_custom_call.1} parent=63 // pred_region
          %s2269 = ssub.s32 16, 16
          %2270 = vsyncadd %s2262, %s2269
          %s2271 = smul.addr %s28, 16
          %s2272 = scalar_lea.hbm %s11, %s2271
          %s2274 = sshll.u32 %s2264, 4
          %s2275 = int_to_ptr.vmem [resolvable:$true] %s2274
          %2277 = dma.vmem_to_hbm [thread:$0]  %s2275, 16, %s2272, %s2262
        $region72: #{tpu_custom_call.1} parent=63 // pred_fallthru
          _
      $region64: #{tpu_custom_call.1} parent=5 // pred_fallthru
        _
      %p2278 = scmp.le.s32.totalorder 2, %s23
      // Predicated region
      $region73: #{tpu_custom_call.1} parent=5 // pred_check
        %p2279 = pneg %p2278
      $region74: #{tpu_custom_call.1} parent=5 // pred_check_branch
        %2281 = sbr.rel (%p2279) target = $region76
      $region75: #{tpu_custom_call.1} parent=5 // pred_region
        %s2282 = ssub.s32 %s23, 2
        // Predicated region
        $region77: #{tpu_custom_call.1} parent=75 // pred_check
          %p2283 = pneg %p293
        $region78: #{tpu_custom_call.1} parent=75 // pred_check_branch
          %2285 = sbr.rel (%p2283) target = $region80
        $region79: #{tpu_custom_call.1} parent=75 // pred_region
          %s2286 = sand.u32 %s278, 1
          %s2287 = scalar_lea.sflag [#allocation4], %s2286
          %s2288 = sand.u32 %s278, 1
          %s2289 = scalar_lea.vmem [#allocation5], %s2288
          %2290 = dma.done %s2287, 16
        $region80: #{tpu_custom_call.1} parent=75 // pred_fallthru
          _
      $region76: #{tpu_custom_call.1} parent=5 // pred_fallthru
        _
    $region6: #{tpu_custom_call.1} parent=1 // loop_footer
      %s27 = sadd.s32 1, %s23
    $region7: #{tpu_custom_call.1} parent=1 // loop_footer_branch
      %22 = sbr.rel target = $region3
    $region8: #{tpu_custom_call.1} parent=1 // loop_exit
      _
    %2291 = vsyncpa [#allocation3], 1
    %s2292 = scalar_lea.sflag [#allocation3], 1
    %2293 = vsyncpa %s2292, 1
    %2294 = vsyncpa [#allocation4], 1
    %s2295 = scalar_lea.sflag [#allocation4], 1
    %2296 = vsyncpa %s2295, 1

</llo_original>
